<compile_context>
chip_gen: v7x
topology: tpu7x:2x2x1
jax: 0.10.0
libtpu: 0.0.40
codegen_flags: <defaults>
</compile_context>

<pallas_src>
from functools import partial

import numpy as np
import jax
import jax.numpy as jnp
from jax.experimental import pallas as pl
from jax.experimental.pallas import tpu as pltpu

_KNN_LANES = 128  # lane-dense width of the index output / running buffers


def _round_up(x, m):
    return ((x + m - 1) // m) * m


# ----------------------------------------------------------------------------
# Kernel 1: fused pairwise squared distances + running top-knn selection.
#   A[i] = [ c_i, ||c_i||^2, 1, 0...],  B^T[:, j] = [-2 c_j; 1; ||c_j||^2; 0...]
#   => (A @ B^T)[i, j] = ||c_i||^2 + ||c_j||^2 - 2 c_i.c_j   (c centered)
#   Running (value, index) top-knn kept in VMEM scratch across the column
#   sweep; only the knn selected column indices are written back to HBM.
# ----------------------------------------------------------------------------
def _knn_kernel(a_ref, bt_ref, idx_ref, val_scr, idx_scr, *, knn, n_valid, tc):
    j = pl.program_id(1)

    @pl.when(j == 0)
    def _():
        val_scr[...] = jnp.full(val_scr.shape, jnp.inf, val_scr.dtype)
        idx_scr[...] = jnp.zeros(idx_scr.shape, idx_scr.dtype)

    # NN matmul on the MXU (rhs pre-transposed on the host, no XLU relayout)
    d2 = jnp.dot(a_ref[...], bt_ref[...], preferred_element_type=jnp.float32)
    d2 = jnp.maximum(d2, 0.0)

    # global column ids for this tile; mask padded columns so they can never
    # be selected as phantom zero-distance neighbors
    col = jax.lax.broadcasted_iota(jnp.int32, d2.shape, 1) + j * tc
    d2 = jnp.where(col < n_valid, d2, jnp.inf)

    rv = val_scr[...]          # (tr, 128) running best values (+inf unused)
    ri = idx_scr[...]          # (tr, 128) running best global column ids
    lane = jax.lax.broadcasted_iota(jnp.int32, rv.shape, 1)
    big = jnp.int32(2 ** 30)

    new_rv = jnp.full(rv.shape, jnp.inf, rv.dtype)
    new_ri = jnp.zeros(ri.shape, ri.dtype)

    # merge running top-knn with this tile's candidates, smallest-first
    for s in range(knn):
        m_t = jnp.min(d2, axis=-1, keepdims=True)
        am_t = jnp.min(jnp.where(d2 == m_t, col, big), axis=-1, keepdims=True)
        m_r = jnp.min(rv, axis=-1, keepdims=True)
        am_r = jnp.min(jnp.where(rv == m_r, ri, big), axis=-1, keepdims=True)

        take_t = m_t <= m_r
        sel_v = jnp.where(take_t, m_t, m_r)
        sel_i = jnp.where(take_t, am_t, am_r)

        new_rv = jnp.where(lane == s, sel_v, new_rv)
        new_ri = jnp.where(lane == s, sel_i, new_ri)

        # remove the chosen element from whichever pool it came from
        d2 = jnp.where(take_t & (col == am_t), jnp.inf, d2)
        rv = jnp.where((~take_t) & (ri == am_r), jnp.inf, rv)

    val_scr[...] = new_rv
    idx_scr[...] = new_ri

    @pl.when(j == pl.num_programs(1) - 1)
    def _():
        idx_ref[...] = new_ri


def _knn_select(coords, knn, *, row_tile=256, col_tile=512):
    """Exact brute-force KNN indices via the fused Pallas kernel."""
    n, d = coords.shape
    assert knn <= _KNN_LANES, "fused top-k kernel supports knn <= 128"
    d_pad = max(8, _round_up(d + 2, 8))              # room for the 2 aug columns

    # column tiling (lane axis): multiple of 128
    tc = min(col_tile, _round_up(n, 128))
    n_pad_c = _round_up(n, tc)

    # row tiling (parallel axis): multiple of 8; prefer >= 2 tiles so the
    # v7x megacore can shard the parallel axis across its 2 TensorCores
    tr = min(row_tile, _round_up(n, 8))
    if _round_up(n, tr) // tr < 2 and tr >= 16:
        tr = max(8, _round_up((n + 1) // 2, 8))
    n_pad_r = _round_up(n, tr)

    c = coords.astype(jnp.float32)
    c = c - jnp.mean(c, axis=0, keepdims=True)       # center: mitigates cancellation
    sq = jnp.sum(c * c, axis=-1)

    a = jnp.zeros((n_pad_r, d_pad), jnp.float32)
    a = a.at[:n, :d].set(c).at[:n, d].set(sq).at[:n, d + 1].set(1.0)
    bt = jnp.zeros((d_pad, n_pad_c), jnp.float32)    # pre-transposed rhs
    bt = bt.at[:d, :n].set(-2.0 * c.T).at[d, :n].set(1.0).at[d + 1, :n].set(sq)

    idx = pl.pallas_call(
        partial(_knn_kernel, knn=knn, n_valid=n, tc=tc),
        out_shape=jax.ShapeDtypeStruct((n_pad_r, _KNN_LANES), jnp.int32),
        grid=(n_pad_r // tr, n_pad_c // tc),
        in_specs=[pl.BlockSpec((tr, d_pad), lambda i, j: (i, 0)),
                  pl.BlockSpec((d_pad, tc), lambda i, j: (0, j))],
        out_specs=pl.BlockSpec((tr, _KNN_LANES), lambda i, j: (i, 0)),
        scratch_shapes=[pltpu.VMEM((tr, _KNN_LANES), jnp.float32),
                        pltpu.VMEM((tr, _KNN_LANES), jnp.int32)],
        compiler_params=pltpu.CompilerParams(
            dimension_semantics=("parallel", "arbitrary"),
            vmem_limit_bytes=32 * 1024 * 1024),
    )(a, bt)
    return idx[:n, :knn]


# ----------------------------------------------------------------------------
# Kernel 2: Gaussian edge embedding, lane-dense packed output.
#   out = exp(m^2 @ W) with W[g, g*n_out + j] = -1 / (2*sigma_j^2);
#   G distance rows are packed per 128-lane-aligned output row.
# ----------------------------------------------------------------------------
def _gauss_embed_kernel(m2_ref, w_ref, o_ref, *, n_out):
    val = jnp.exp(jnp.dot(m2_ref[...], w_ref[...],
                          preferred_element_type=jnp.float32))
    val = jnp.where(jnp.isnan(val), 0.0, val)        # reference torch.isnan handling
    o_ref[...] = val

    @pl.when(pl.program_id(0) == 0)
    def _():
        # global row 0 (group 0 of packed row 0) must be all zeros
        lane = jax.lax.broadcasted_iota(jnp.int32, (1, val.shape[1]), 1)
        o_ref[0:1, :] = jnp.where(lane < n_out, 0.0, val[0:1, :])


def _gaussian_embedding(M, sigmas_np, tile_rows=1024):
    L = M.shape[0]
    n_out = int(sigmas_np.shape[0])

    # pack G rows per output row; prefer G*n_out to be an exact multiple of
    # 128 lanes (no wasted EUP work, no lane-unaligned epilogue slice)
    G = int(np.lcm(n_out, 128) // n_out)
    if G * n_out > 4096 or G > 128:
        G = max(1, 128 // n_out)
    width = G * n_out
    width_pad = _round_up(width, 128)
    G_pad = max(8, _round_up(G, 8))

    L_pack = -(-L // G)
    t = min(tile_rows, max(8, _round_up(L_pack, 8)))
    t_cap = max(8, ((4 * 1024 * 1024) // (width_pad * 4)) // 8 * 8)  # VMEM headroom
    t = min(t, t_cap)
    if _round_up(L_pack, t) // t < 2 and t >= 16:    # >= 2 steps for v7x megacore
        t = max(8, _round_up(-(-L_pack // 2), 8))
    L_pack_pad = _round_up(L_pack, t)

    m2 = M.astype(jnp.float32) ** 2
    m2 = jnp.pad(m2, (0, L_pack_pad * G - L))        # padded tail -> exp(0)=1, sliced off
    m2 = m2.reshape(L_pack_pad, G)
    m2 = jnp.pad(m2, ((0, 0), (0, G_pad - G)))

    inv = -1.0 / (2.0 * np.asarray(sigmas_np, np.float32) ** 2)
    w_np = np.zeros((G_pad, width_pad), np.float32)
    for g in range(G):
        w_np[g, g * n_out:(g + 1) * n_out] = inv
    w = jnp.asarray(w_np)

    out = pl.pallas_call(
        partial(_gauss_embed_kernel, n_out=n_out),
        out_shape=jax.ShapeDtypeStruct((L_pack_pad, width_pad), jnp.float32),
        grid=(L_pack_pad // t,),
        in_specs=[pl.BlockSpec((t, G_pad), lambda i: (i, 0)),
                  pl.BlockSpec((G_pad, width_pad), lambda i: (0, 0))],
        out_specs=pl.BlockSpec((t, width_pad), lambda i: (i, 0)),
        compiler_params=pltpu.CompilerParams(
            dimension_semantics=("parallel",),
            vmem_limit_bytes=32 * 1024 * 1024),
    )(m2, w)

    if width != width_pad:
        out = out[:, :width]
    out = out.reshape(L_pack_pad * G, n_out)
    return out[:L]


# ----------------------------------------------------------------------------
# Device-side forward (fused distances+KNN -> exact recompute -> embedding).
# ----------------------------------------------------------------------------
@partial(jax.jit, static_argnames=("n_out", "sigma", "knn"))
def _device_forward(coords, *, n_out, sigma, knn):
    # TODO(synk): scipy KDTree spatial indexing has no Pallas equivalent;
    # exact KNN is obtained via the fused brute-force distance + top-k kernel.
    idx_sel = _knn_select(coords, knn)                 # Pallas kernel (MXU + VPU/XLU)

    # exact distance recompute for the selected pairs (avoids f32 cancellation)
    c = coords.astype(jnp.float32)
    diff = c[:, None, :] - c[idx_sel]                  # (n, knn, d)
    dist = jnp.sqrt(jnp.sum(diff * diff, axis=-1))
    order = jnp.argsort(dist, axis=1)
    dist = jnp.take_along_axis(dist, order, axis=1)
    idx = jnp.take_along_axis(idx_sel, order, axis=1)

    M = jnp.pad(dist.reshape(-1), (1, 0))              # (n*knn + 1,)
    rng = np.linspace(sigma[0], sigma[1], n_out).astype(np.float32)
    k_dist_range = _gaussian_embedding(M, rng)         # Pallas kernel (MXU + EUP)
    return k_dist_range, dist, idx


# ----------------------------------------------------------------------------
# Host-side index bookkeeping (verbatim semantics of the reference numpy code)
# ----------------------------------------------------------------------------
def _build_index_metadata(distances_np, indices_np, knn):
    n = distances_np.shape[0]
    M = distances_np.flatten()
    all_ij_id = np.array((np.repeat(np.arange(n), knn), indices_np.flatten())).T
    row_idx = np.repeat(np.arange(0, len(M)).reshape(n, knn), knn, axis=0).reshape(len(M), knn)
    row_idx = np.vstack((np.repeat(0, knn), row_idx))
    col_lists = [np.where(all_ij_id[:, 1] == i)[0] + 1 for i in range(n)]
    col_idx = np.array([np.pad(c, (0, knn - len(c))) if len(c) <= knn
                        else c[np.argsort(M[c - 1])[:knn]] for c in col_lists])
    col_idx = np.repeat(col_idx, knn, axis=0)
    col_idx = np.vstack((np.repeat(0, knn), col_idx))
    return row_idx.astype(np.int32), col_idx.astype(np.int32), all_ij_id.astype(np.int32)


# ----------------------------------------------------------------------------
# Forward pass (equivalent of SparseEdgeEmbeddingV4.forward)
# ----------------------------------------------------------------------------
def sparse_edge_embedding_v4(input_coord, n_out, sigma, knn):
    n = int(input_coord.shape[0])
    if n < knn:
        knn = n  # same adjustment as the reference (df_knn restore is a no-op per call)

    # enqueue ALL device work first (async dispatch) ...
    k_dist_range, dist, idx = _device_forward(
        input_coord, n_out=int(n_out),
        sigma=tuple(float(s) for s in sigma), knn=int(knn))

    # ... then do the host-side ragged numpy bookkeeping while the embedding
    # kernel may still be running on device.
    row_idx, col_idx, all_ij_id = _build_index_metadata(
        np.asarray(dist), np.asarray(idx), knn)

    return k_dist_range, [row_idx, col_idx, (n, n), all_ij_id]


if __name__ == "__main__":
    key = jax.random.PRNGKey(0)
    n, d = 16, 3
    knn = 8
    n_out = 32
    sigma = [0.2, 5.0]

    input_coord = jax.random.uniform(key, (n, d), dtype=jnp.float32) * 10.0

    k_dist_range, meta = sparse_edge_embedding_v4(input_coord, n_out=n_out,
                                                  sigma=sigma, knn=knn)
    k_dist_range = jax.block_until_ready(k_dist_range)

    row_idx, col_idx, shape_nn, all_ij_id = meta
    assert k_dist_range.shape == (n * knn + 1, n_out)
    assert k_dist_range.dtype == jnp.float32
    assert bool(jnp.all(k_dist_range[0] == 0.0))
    assert bool(jnp.all(jnp.isfinite(k_dist_range)))
    assert row_idx.shape == (n * knn + 1, knn) and row_idx.dtype == np.int32
    assert col_idx.shape == (n * knn + 1, knn) and col_idx.dtype == np.int32
    assert all_ij_id.shape == (n * knn, 2) and all_ij_id.dtype == np.int32
    assert shape_nn == (n, n)

    # numerical cross-check against a pure-numpy reference of the hot path
    coords_np = np.asarray(input_coord, dtype=np.float64)
    d2_ref = ((coords_np[:, None, :] - coords_np[None, :, :]) ** 2).sum(-1)
    dist_ref = np.sqrt(d2_ref)
    dsorted = np.sort(dist_ref, axis=1)[:, :knn]
    M_ref = np.pad(dsorted.flatten(), (1, 0))
    rng_ref = np.linspace(sigma[0], sigma[1], n_out)
    k_ref = np.exp(-M_ref[:, None] ** 2 / (2.0 * rng_ref[None, :] ** 2))
    k_ref[0, :] = 0.0
    np.testing.assert_allclose(np.asarray(k_dist_range), k_ref, rtol=2e-4, atol=2e-5)

    print("KERNEL_OK")
</pallas_src>

<mosaic_0001>
module attributes {stable_mosaic.version = 11 : i64} {
  func.func @_knn_kernel(%arg0: i32, %arg1: i32, %arg2: memref<8x8xf32, #tpu.memory_space<vmem>>, %arg3: memref<8x128xf32, #tpu.memory_space<vmem>>, %arg4: memref<8x128xi32, #tpu.memory_space<vmem>>, %arg5: memref<8x128xf32, #tpu.memory_space<vmem>>, %arg6: memref<8x128xi32, #tpu.memory_space<vmem>>) attributes {dimension_semantics = [#tpu.dimension_semantics<parallel>, #tpu.dimension_semantics<arbitrary>], iteration_bounds = array<i64: 2, 1>, scalar_prefetch = 0 : i64, scratch_operands = 2 : i64, tpu.core_type = #tpu.core_type<tc>, window_params = [{transform_indices = @transform_0, window_bounds = array<i64: 8, 8>}, {transform_indices = @transform_1, window_bounds = array<i64: 8, 128>}, {transform_indices = @transform_2, window_bounds = array<i64: 8, 128>}]} {
    %c0_i32 = arith.constant 0 : i32
    %0 = arith.cmpi eq, %arg1, %c0_i32 : i32
    %1 = arith.extui %0 : i1 to i32
    %c0_i32_0 = arith.constant 0 : i32
    %2 = arith.cmpi ne, %1, %c0_i32_0 : i32
    scf.if %2 {
      %cst_95 = arith.constant 0x7F800000 : f32
      %349 = vector.broadcast %cst_95 : f32 to vector<8x128xf32>
      %c0_96 = arith.constant 0 : index
      %c0_97 = arith.constant 0 : index
      %350 = vector.load %arg5[%c0_96, %c0_97] : memref<8x128xf32, #tpu.memory_space<vmem>>, vector<8x128xf32>
      tpu.vector_store %arg5[%c0_96, %c0_97], %349 {strides = array<i32>} : memref<8x128xf32, #tpu.memory_space<vmem>>, vector<8x128xf32>,
      %c0_i32_98 = arith.constant 0 : i32
      %351 = vector.broadcast %c0_i32_98 : i32 to vector<8x128xi32>
      %c0_99 = arith.constant 0 : index
      %c0_100 = arith.constant 0 : index
      %352 = vector.load %arg6[%c0_99, %c0_100] : memref<8x128xi32, #tpu.memory_space<vmem>>, vector<8x128xi32>
      tpu.vector_store %arg6[%c0_99, %c0_100], %351 {strides = array<i32>} : memref<8x128xi32, #tpu.memory_space<vmem>>, vector<8x128xi32>,
    } else {
    }
    %c0 = arith.constant 0 : index
    %c0_1 = arith.constant 0 : index
    %3 = vector.load %arg2[%c0, %c0_1] : memref<8x8xf32, #tpu.memory_space<vmem>>, vector<8x8xf32>
    %c0_2 = arith.constant 0 : index
    %c0_3 = arith.constant 0 : index
    %4 = vector.load %arg3[%c0_2, %c0_3] : memref<8x128xf32, #tpu.memory_space<vmem>>, vector<8x128xf32>
    %cst = arith.constant dense<0.000000e+00> : vector<8x128xf32>
    %5 = tpu.matmul %3, %4, %cst {dimension_numbers = #tpu.dot_dimension_numbers<[1], [0], [0], [1], [0, 0, 1, 1], [], []>} : vector<8x8xf32>, vector<8x128xf32>, vector<8x128xf32> -> vector<8x128xf32>
    %cst_4 = arith.constant 0.000000e+00 : f32
    %6 = vector.broadcast %cst_4 : f32 to vector<8x128xf32>
    %7 = arith.maximumf %5, %6 : vector<8x128xf32>
    %8 = tpu.iota {dimensions = array<i32: 1>} : vector<8x128xi32>
    %c128_i32 = arith.constant 128 : i32
    %9 = arith.muli %arg1, %c128_i32 : i32
    %10 = vector.broadcast %9 : i32 to vector<8x128xi32>
    %11 = arith.addi %8, %10 : vector<8x128xi32>
    %c16_i32 = arith.constant 16 : i32
    %12 = vector.broadcast %c16_i32 : i32 to vector<8x128xi32>
    %13 = arith.cmpi slt, %11, %12 : vector<8x128xi32>
    %cst_5 = arith.constant 0x7F800000 : f32
    %14 = vector.broadcast %cst_5 : f32 to vector<8x128xf32>
    %15 = arith.select %13, %7, %14 : vector<8x128xi1>, vector<8x128xf32>
    %c0_6 = arith.constant 0 : index
    %c0_7 = arith.constant 0 : index
    %16 = vector.load %arg5[%c0_6, %c0_7] : memref<8x128xf32, #tpu.memory_space<vmem>>, vector<8x128xf32>
    %c0_8 = arith.constant 0 : index
    %c0_9 = arith.constant 0 : index
    %17 = vector.load %arg6[%c0_8, %c0_9] : memref<8x128xi32, #tpu.memory_space<vmem>>, vector<8x128xi32>
    %18 = tpu.iota {dimensions = array<i32: 1>} : vector<8x128xi32>
    %cst_10 = arith.constant 0x7F800000 : f32
    %19 = vector.broadcast %cst_10 : f32 to vector<8x128xf32>
    %c0_i32_11 = arith.constant 0 : i32
    %20 = vector.broadcast %c0_i32_11 : i32 to vector<8x128xi32>
    %cst_12 = arith.constant dense<0x7F800000> : vector<8xf32>
    %21 = vector.multi_reduction <minimumf>, %15, %cst_12 [1] : vector<8x128xf32> to vector<8xf32>
    %22 = vector.shape_cast %21 : vector<8xf32> to vector<8x1xf32>
    %23 = vector.broadcast %22 : vector<8x1xf32> to vector<8x128xf32>
    %24 = arith.cmpf oeq, %15, %23 : vector<8x128xf32>
    %c1073741824_i32 = arith.constant 1073741824 : i32
    %25 = vector.broadcast %c1073741824_i32 : i32 to vector<8x128xi32>
    %26 = arith.select %24, %11, %25 : vector<8x128xi1>, vector<8x128xi32>
    %cst_13 = arith.constant dense<2147483647> : vector<8xi32>
    %27 = vector.multi_reduction <minsi>, %26, %cst_13 [1] : vector<8x128xi32> to vector<8xi32>
    %28 = vector.shape_cast %27 : vector<8xi32> to vector<8x1xi32>
    %cst_14 = arith.constant dense<0x7F800000> : vector<8xf32>
    %29 = vector.multi_reduction <minimumf>, %16, %cst_14 [1] : vector<8x128xf32> to vector<8xf32>
    %30 = vector.shape_cast %29 : vector<8xf32> to vector<8x1xf32>
    %31 = vector.broadcast %30 : vector<8x1xf32> to vector<8x128xf32>
    %32 = arith.cmpf oeq, %16, %31 : vector<8x128xf32>
    %c1073741824_i32_15 = arith.constant 1073741824 : i32
    %33 = vector.broadcast %c1073741824_i32_15 : i32 to vector<8x128xi32>
    %34 = arith.select %32, %17, %33 : vector<8x128xi1>, vector<8x128xi32>
    %cst_16 = arith.constant dense<2147483647> : vector<8xi32>
    %35 = vector.multi_reduction <minsi>, %34, %cst_16 [1] : vector<8x128xi32> to vector<8xi32>
    %36 = vector.shape_cast %35 : vector<8xi32> to vector<8x1xi32>
    %37 = arith.cmpf ole, %22, %30 : vector<8x1xf32>
    %38 = arith.select %37, %22, %30 : vector<8x1xi1>, vector<8x1xf32>
    %39 = arith.select %37, %28, %36 : vector<8x1xi1>, vector<8x1xi32>
    %c0_i32_17 = arith.constant 0 : i32
    %40 = vector.broadcast %c0_i32_17 : i32 to vector<8x128xi32>
    %41 = arith.cmpi eq, %18, %40 : vector<8x128xi32>
    %42 = vector.shape_cast %38 : vector<8x1xf32> to vector<8x1xf32>
    %43 = vector.broadcast %42 : vector<8x1xf32> to vector<8x128xf32>
    %44 = arith.select %41, %43, %19 : vector<8x128xi1>, vector<8x128xf32>
    %c0_i32_18 = arith.constant 0 : i32
    %45 = vector.broadcast %c0_i32_18 : i32 to vector<8x128xi32>
    %46 = arith.cmpi eq, %18, %45 : vector<8x128xi32>
    %47 = vector.shape_cast %39 : vector<8x1xi32> to vector<8x1xi32>
    %48 = vector.broadcast %47 : vector<8x1xi32> to vector<8x128xi32>
    %49 = arith.select %46, %48, %20 : vector<8x128xi1>, vector<8x128xi32>
    %50 = vector.broadcast %28 : vector<8x1xi32> to vector<8x128xi32>
    %51 = arith.cmpi eq, %11, %50 : vector<8x128xi32>
    %52 = vector.broadcast %37 : vector<8x1xi1> to vector<8x128xi1>
    %53 = arith.andi %52, %51 : vector<8x128xi1>
    %cst_19 = arith.constant 0x7F800000 : f32
    %54 = vector.broadcast %cst_19 : f32 to vector<8x128xf32>
    %55 = arith.select %53, %54, %15 : vector<8x128xi1>, vector<8x128xf32>
    %cst_20 = arith.constant dense<true> : vector<8x1xi1>
    %56 = arith.xori %37, %cst_20 : vector<8x1xi1>
    %57 = vector.broadcast %36 : vector<8x1xi32> to vector<8x128xi32>
    %58 = arith.cmpi eq, %17, %57 : vector<8x128xi32>
    %59 = vector.broadcast %56 : vector<8x1xi1> to vector<8x128xi1>
    %60 = arith.andi %59, %58 : vector<8x128xi1>
    %cst_21 = arith.constant 0x7F800000 : f32
    %61 = vector.broadcast %cst_21 : f32 to vector<8x128xf32>
    %62 = arith.select %60, %61, %16 : vector<8x128xi1>, vector<8x128xf32>
    %cst_22 = arith.constant dense<0x7F800000> : vector<8xf32>
    %63 = vector.multi_reduction <minimumf>, %55, %cst_22 [1] : vector<8x128xf32> to vector<8xf32>
    %64 = vector.shape_cast %63 : vector<8xf32> to vector<8x1xf32>
    %65 = vector.broadcast %64 : vector<8x1xf32> to vector<8x128xf32>
    %66 = arith.cmpf oeq, %55, %65 : vector<8x128xf32>
    %c1073741824_i32_23 = arith.constant 1073741824 : i32
    %67 = vector.broadcast %c1073741824_i32_23 : i32 to vector<8x128xi32>
    %68 = arith.select %66, %11, %67 : vector<8x128xi1>, vector<8x128xi32>
    %cst_24 = arith.constant dense<2147483647> : vector<8xi32>
    %69 = vector.multi_reduction <minsi>, %68, %cst_24 [1] : vector<8x128xi32> to vector<8xi32>
    %70 = vector.shape_cast %69 : vector<8xi32> to vector<8x1xi32>
    %cst_25 = arith.constant dense<0x7F800000> : vector<8xf32>
    %71 = vector.multi_reduction <minimumf>, %62, %cst_25 [1] : vector<8x128xf32> to vector<8xf32>
    %72 = vector.shape_cast %71 : vector<8xf32> to vector<8x1xf32>
    %73 = vector.broadcast %72 : vector<8x1xf32> to vector<8x128xf32>
    %74 = arith.cmpf oeq, %62, %73 : vector<8x128xf32>
    %c1073741824_i32_26 = arith.constant 1073741824 : i32
    %75 = vector.broadcast %c1073741824_i32_26 : i32 to vector<8x128xi32>
    %76 = arith.select %74, %17, %75 : vector<8x128xi1>, vector<8x128xi32>
    %cst_27 = arith.constant dense<2147483647> : vector<8xi32>
    %77 = vector.multi_reduction <minsi>, %76, %cst_27 [1] : vector<8x128xi32> to vector<8xi32>
    %78 = vector.shape_cast %77 : vector<8xi32> to vector<8x1xi32>
    %79 = arith.cmpf ole, %64, %72 : vector<8x1xf32>
    %80 = arith.select %79, %64, %72 : vector<8x1xi1>, vector<8x1xf32>
    %81 = arith.select %79, %70, %78 : vector<8x1xi1>, vector<8x1xi32>
    %c1_i32 = arith.constant 1 : i32
    %82 = vector.broadcast %c1_i32 : i32 to vector<8x128xi32>
    %83 = arith.cmpi eq, %18, %82 : vector<8x128xi32>
    %84 = vector.shape_cast %80 : vector<8x1xf32> to vector<8x1xf32>
    %85 = vector.broadcast %84 : vector<8x1xf32> to vector<8x128xf32>
    %86 = arith.select %83, %85, %44 : vector<8x128xi1>, vector<8x128xf32>
    %c1_i32_28 = arith.constant 1 : i32
    %87 = vector.broadcast %c1_i32_28 : i32 to vector<8x128xi32>
    %88 = arith.cmpi eq, %18, %87 : vector<8x128xi32>
    %89 = vector.shape_cast %81 : vector<8x1xi32> to vector<8x1xi32>
    %90 = vector.broadcast %89 : vector<8x1xi32> to vector<8x128xi32>
    %91 = arith.select %88, %90, %49 : vector<8x128xi1>, vector<8x128xi32>
    %92 = vector.broadcast %70 : vector<8x1xi32> to vector<8x128xi32>
    %93 = arith.cmpi eq, %11, %92 : vector<8x128xi32>
    %94 = vector.broadcast %79 : vector<8x1xi1> to vector<8x128xi1>
    %95 = arith.andi %94, %93 : vector<8x128xi1>
    %cst_29 = arith.constant 0x7F800000 : f32
    %96 = vector.broadcast %cst_29 : f32 to vector<8x128xf32>
    %97 = arith.select %95, %96, %55 : vector<8x128xi1>, vector<8x128xf32>
    %cst_30 = arith.constant dense<true> : vector<8x1xi1>
    %98 = arith.xori %79, %cst_30 : vector<8x1xi1>
    %99 = vector.broadcast %78 : vector<8x1xi32> to vector<8x128xi32>
    %100 = arith.cmpi eq, %17, %99 : vector<8x128xi32>
    %101 = vector.broadcast %98 : vector<8x1xi1> to vector<8x128xi1>
    %102 = arith.andi %101, %100 : vector<8x128xi1>
    %cst_31 = arith.constant 0x7F800000 : f32
    %103 = vector.broadcast %cst_31 : f32 to vector<8x128xf32>
    %104 = arith.select %102, %103, %62 : vector<8x128xi1>, vector<8x128xf32>
    %cst_32 = arith.constant dense<0x7F800000> : vector<8xf32>
    %105 = vector.multi_reduction <minimumf>, %97, %cst_32 [1] : vector<8x128xf32> to vector<8xf32>
    %106 = vector.shape_cast %105 : vector<8xf32> to vector<8x1xf32>
    %107 = vector.broadcast %106 : vector<8x1xf32> to vector<8x128xf32>
    %108 = arith.cmpf oeq, %97, %107 : vector<8x128xf32>
    %c1073741824_i32_33 = arith.constant 1073741824 : i32
    %109 = vector.broadcast %c1073741824_i32_33 : i32 to vector<8x128xi32>
    %110 = arith.select %108, %11, %109 : vector<8x128xi1>, vector<8x128xi32>
    %cst_34 = arith.constant dense<2147483647> : vector<8xi32>
    %111 = vector.multi_reduction <minsi>, %110, %cst_34 [1] : vector<8x128xi32> to vector<8xi32>
    %112 = vector.shape_cast %111 : vector<8xi32> to vector<8x1xi32>
    %cst_35 = arith.constant dense<0x7F800000> : vector<8xf32>
    %113 = vector.multi_reduction <minimumf>, %104, %cst_35 [1] : vector<8x128xf32> to vector<8xf32>
    %114 = vector.shape_cast %113 : vector<8xf32> to vector<8x1xf32>
    %115 = vector.broadcast %114 : vector<8x1xf32> to vector<8x128xf32>
    %116 = arith.cmpf oeq, %104, %115 : vector<8x128xf32>
    %c1073741824_i32_36 = arith.constant 1073741824 : i32
    %117 = vector.broadcast %c1073741824_i32_36 : i32 to vector<8x128xi32>
    %118 = arith.select %116, %17, %117 : vector<8x128xi1>, vector<8x128xi32>
    %cst_37 = arith.constant dense<2147483647> : vector<8xi32>
    %119 = vector.multi_reduction <minsi>, %118, %cst_37 [1] : vector<8x128xi32> to vector<8xi32>
    %120 = vector.shape_cast %119 : vector<8xi32> to vector<8x1xi32>
    %121 = arith.cmpf ole, %106, %114 : vector<8x1xf32>
    %122 = arith.select %121, %106, %114 : vector<8x1xi1>, vector<8x1xf32>
    %123 = arith.select %121, %112, %120 : vector<8x1xi1>, vector<8x1xi32>
    %c2_i32 = arith.constant 2 : i32
    %124 = vector.broadcast %c2_i32 : i32 to vector<8x128xi32>
    %125 = arith.cmpi eq, %18, %124 : vector<8x128xi32>
    %126 = vector.shape_cast %122 : vector<8x1xf32> to vector<8x1xf32>
    %127 = vector.broadcast %126 : vector<8x1xf32> to vector<8x128xf32>
    %128 = arith.select %125, %127, %86 : vector<8x128xi1>, vector<8x128xf32>
    %c2_i32_38 = arith.constant 2 : i32
    %129 = vector.broadcast %c2_i32_38 : i32 to vector<8x128xi32>
    %130 = arith.cmpi eq, %18, %129 : vector<8x128xi32>
    %131 = vector.shape_cast %123 : vector<8x1xi32> to vector<8x1xi32>
    %132 = vector.broadcast %131 : vector<8x1xi32> to vector<8x128xi32>
    %133 = arith.select %130, %132, %91 : vector<8x128xi1>, vector<8x128xi32>
    %134 = vector.broadcast %112 : vector<8x1xi32> to vector<8x128xi32>
    %135 = arith.cmpi eq, %11, %134 : vector<8x128xi32>
    %136 = vector.broadcast %121 : vector<8x1xi1> to vector<8x128xi1>
    %137 = arith.andi %136, %135 : vector<8x128xi1>
    %cst_39 = arith.constant 0x7F800000 : f32
    %138 = vector.broadcast %cst_39 : f32 to vector<8x128xf32>
    %139 = arith.select %137, %138, %97 : vector<8x128xi1>, vector<8x128xf32>
    %cst_40 = arith.constant dense<true> : vector<8x1xi1>
    %140 = arith.xori %121, %cst_40 : vector<8x1xi1>
    %141 = vector.broadcast %120 : vector<8x1xi32> to vector<8x128xi32>
    %142 = arith.cmpi eq, %17, %141 : vector<8x128xi32>
    %143 = vector.broadcast %140 : vector<8x1xi1> to vector<8x128xi1>
    %144 = arith.andi %143, %142 : vector<8x128xi1>
    %cst_41 = arith.constant 0x7F800000 : f32
    %145 = vector.broadcast %cst_41 : f32 to vector<8x128xf32>
    %146 = arith.select %144, %145, %104 : vector<8x128xi1>, vector<8x128xf32>
    %cst_42 = arith.constant dense<0x7F800000> : vector<8xf32>
    %147 = vector.multi_reduction <minimumf>, %139, %cst_42 [1] : vector<8x128xf32> to vector<8xf32>
    %148 = vector.shape_cast %147 : vector<8xf32> to vector<8x1xf32>
    %149 = vector.broadcast %148 : vector<8x1xf32> to vector<8x128xf32>
    %150 = arith.cmpf oeq, %139, %149 : vector<8x128xf32>
    %c1073741824_i32_43 = arith.constant 1073741824 : i32
    %151 = vector.broadcast %c1073741824_i32_43 : i32 to vector<8x128xi32>
    %152 = arith.select %150, %11, %151 : vector<8x128xi1>, vector<8x128xi32>
    %cst_44 = arith.constant dense<2147483647> : vector<8xi32>
    %153 = vector.multi_reduction <minsi>, %152, %cst_44 [1] : vector<8x128xi32> to vector<8xi32>
    %154 = vector.shape_cast %153 : vector<8xi32> to vector<8x1xi32>
    %cst_45 = arith.constant dense<0x7F800000> : vector<8xf32>
    %155 = vector.multi_reduction <minimumf>, %146, %cst_45 [1] : vector<8x128xf32> to vector<8xf32>
    %156 = vector.shape_cast %155 : vector<8xf32> to vector<8x1xf32>
    %157 = vector.broadcast %156 : vector<8x1xf32> to vector<8x128xf32>
    %158 = arith.cmpf oeq, %146, %157 : vector<8x128xf32>
    %c1073741824_i32_46 = arith.constant 1073741824 : i32
    %159 = vector.broadcast %c1073741824_i32_46 : i32 to vector<8x128xi32>
    %160 = arith.select %158, %17, %159 : vector<8x128xi1>, vector<8x128xi32>
    %cst_47 = arith.constant dense<2147483647> : vector<8xi32>
    %161 = vector.multi_reduction <minsi>, %160, %cst_47 [1] : vector<8x128xi32> to vector<8xi32>
    %162 = vector.shape_cast %161 : vector<8xi32> to vector<8x1xi32>
    %163 = arith.cmpf ole, %148, %156 : vector<8x1xf32>
    %164 = arith.select %163, %148, %156 : vector<8x1xi1>, vector<8x1xf32>
    %165 = arith.select %163, %154, %162 : vector<8x1xi1>, vector<8x1xi32>
    %c3_i32 = arith.constant 3 : i32
    %166 = vector.broadcast %c3_i32 : i32 to vector<8x128xi32>
    %167 = arith.cmpi eq, %18, %166 : vector<8x128xi32>
    %168 = vector.shape_cast %164 : vector<8x1xf32> to vector<8x1xf32>
    %169 = vector.broadcast %168 : vector<8x1xf32> to vector<8x128xf32>
    %170 = arith.select %167, %169, %128 : vector<8x128xi1>, vector<8x128xf32>
    %c3_i32_48 = arith.constant 3 : i32
    %171 = vector.broadcast %c3_i32_48 : i32 to vector<8x128xi32>
    %172 = arith.cmpi eq, %18, %171 : vector<8x128xi32>
    %173 = vector.shape_cast %165 : vector<8x1xi32> to vector<8x1xi32>
    %174 = vector.broadcast %173 : vector<8x1xi32> to vector<8x128xi32>
    %175 = arith.select %172, %174, %133 : vector<8x128xi1>, vector<8x128xi32>
    %176 = vector.broadcast %154 : vector<8x1xi32> to vector<8x128xi32>
    %177 = arith.cmpi eq, %11, %176 : vector<8x128xi32>
    %178 = vector.broadcast %163 : vector<8x1xi1> to vector<8x128xi1>
    %179 = arith.andi %178, %177 : vector<8x128xi1>
    %cst_49 = arith.constant 0x7F800000 : f32
    %180 = vector.broadcast %cst_49 : f32 to vector<8x128xf32>
    %181 = arith.select %179, %180, %139 : vector<8x128xi1>, vector<8x128xf32>
    %cst_50 = arith.constant dense<true> : vector<8x1xi1>
    %182 = arith.xori %163, %cst_50 : vector<8x1xi1>
    %183 = vector.broadcast %162 : vector<8x1xi32> to vector<8x128xi32>
    %184 = arith.cmpi eq, %17, %183 : vector<8x128xi32>
    %185 = vector.broadcast %182 : vector<8x1xi1> to vector<8x128xi1>
    %186 = arith.andi %185, %184 : vector<8x128xi1>
    %cst_51 = arith.constant 0x7F800000 : f32
    %187 = vector.broadcast %cst_51 : f32 to vector<8x128xf32>
    %188 = arith.select %186, %187, %146 : vector<8x128xi1>, vector<8x128xf32>
    %cst_52 = arith.constant dense<0x7F800000> : vector<8xf32>
    %189 = vector.multi_reduction <minimumf>, %181, %cst_52 [1] : vector<8x128xf32> to vector<8xf32>
    %190 = vector.shape_cast %189 : vector<8xf32> to vector<8x1xf32>
    %191 = vector.broadcast %190 : vector<8x1xf32> to vector<8x128xf32>
    %192 = arith.cmpf oeq, %181, %191 : vector<8x128xf32>
    %c1073741824_i32_53 = arith.constant 1073741824 : i32
    %193 = vector.broadcast %c1073741824_i32_53 : i32 to vector<8x128xi32>
    %194 = arith.select %192, %11, %193 : vector<8x128xi1>, vector<8x128xi32>
    %cst_54 = arith.constant dense<2147483647> : vector<8xi32>
    %195 = vector.multi_reduction <minsi>, %194, %cst_54 [1] : vector<8x128xi32> to vector<8xi32>
    %196 = vector.shape_cast %195 : vector<8xi32> to vector<8x1xi32>
    %cst_55 = arith.constant dense<0x7F800000> : vector<8xf32>
    %197 = vector.multi_reduction <minimumf>, %188, %cst_55 [1] : vector<8x128xf32> to vector<8xf32>
    %198 = vector.shape_cast %197 : vector<8xf32> to vector<8x1xf32>
    %199 = vector.broadcast %198 : vector<8x1xf32> to vector<8x128xf32>
    %200 = arith.cmpf oeq, %188, %199 : vector<8x128xf32>
    %c1073741824_i32_56 = arith.constant 1073741824 : i32
    %201 = vector.broadcast %c1073741824_i32_56 : i32 to vector<8x128xi32>
    %202 = arith.select %200, %17, %201 : vector<8x128xi1>, vector<8x128xi32>
    %cst_57 = arith.constant dense<2147483647> : vector<8xi32>
    %203 = vector.multi_reduction <minsi>, %202, %cst_57 [1] : vector<8x128xi32> to vector<8xi32>
    %204 = vector.shape_cast %203 : vector<8xi32> to vector<8x1xi32>
    %205 = arith.cmpf ole, %190, %198 : vector<8x1xf32>
    %206 = arith.select %205, %190, %198 : vector<8x1xi1>, vector<8x1xf32>
    %207 = arith.select %205, %196, %204 : vector<8x1xi1>, vector<8x1xi32>
    %c4_i32 = arith.constant 4 : i32
    %208 = vector.broadcast %c4_i32 : i32 to vector<8x128xi32>
    %209 = arith.cmpi eq, %18, %208 : vector<8x128xi32>
    %210 = vector.shape_cast %206 : vector<8x1xf32> to vector<8x1xf32>
    %211 = vector.broadcast %210 : vector<8x1xf32> to vector<8x128xf32>
    %212 = arith.select %209, %211, %170 : vector<8x128xi1>, vector<8x128xf32>
    %c4_i32_58 = arith.constant 4 : i32
    %213 = vector.broadcast %c4_i32_58 : i32 to vector<8x128xi32>
    %214 = arith.cmpi eq, %18, %213 : vector<8x128xi32>
    %215 = vector.shape_cast %207 : vector<8x1xi32> to vector<8x1xi32>
    %216 = vector.broadcast %215 : vector<8x1xi32> to vector<8x128xi32>
    %217 = arith.select %214, %216, %175 : vector<8x128xi1>, vector<8x128xi32>
    %218 = vector.broadcast %196 : vector<8x1xi32> to vector<8x128xi32>
    %219 = arith.cmpi eq, %11, %218 : vector<8x128xi32>
    %220 = vector.broadcast %205 : vector<8x1xi1> to vector<8x128xi1>
    %221 = arith.andi %220, %219 : vector<8x128xi1>
    %cst_59 = arith.constant 0x7F800000 : f32
    %222 = vector.broadcast %cst_59 : f32 to vector<8x128xf32>
    %223 = arith.select %221, %222, %181 : vector<8x128xi1>, vector<8x128xf32>
    %cst_60 = arith.constant dense<true> : vector<8x1xi1>
    %224 = arith.xori %205, %cst_60 : vector<8x1xi1>
    %225 = vector.broadcast %204 : vector<8x1xi32> to vector<8x128xi32>
    %226 = arith.cmpi eq, %17, %225 : vector<8x128xi32>
    %227 = vector.broadcast %224 : vector<8x1xi1> to vector<8x128xi1>
    %228 = arith.andi %227, %226 : vector<8x128xi1>
    %cst_61 = arith.constant 0x7F800000 : f32
    %229 = vector.broadcast %cst_61 : f32 to vector<8x128xf32>
    %230 = arith.select %228, %229, %188 : vector<8x128xi1>, vector<8x128xf32>
    %cst_62 = arith.constant dense<0x7F800000> : vector<8xf32>
    %231 = vector.multi_reduction <minimumf>, %223, %cst_62 [1] : vector<8x128xf32> to vector<8xf32>
    %232 = vector.shape_cast %231 : vector<8xf32> to vector<8x1xf32>
    %233 = vector.broadcast %232 : vector<8x1xf32> to vector<8x128xf32>
    %234 = arith.cmpf oeq, %223, %233 : vector<8x128xf32>
    %c1073741824_i32_63 = arith.constant 1073741824 : i32
    %235 = vector.broadcast %c1073741824_i32_63 : i32 to vector<8x128xi32>
    %236 = arith.select %234, %11, %235 : vector<8x128xi1>, vector<8x128xi32>
    %cst_64 = arith.constant dense<2147483647> : vector<8xi32>
    %237 = vector.multi_reduction <minsi>, %236, %cst_64 [1] : vector<8x128xi32> to vector<8xi32>
    %238 = vector.shape_cast %237 : vector<8xi32> to vector<8x1xi32>
    %cst_65 = arith.constant dense<0x7F800000> : vector<8xf32>
    %239 = vector.multi_reduction <minimumf>, %230, %cst_65 [1] : vector<8x128xf32> to vector<8xf32>
    %240 = vector.shape_cast %239 : vector<8xf32> to vector<8x1xf32>
    %241 = vector.broadcast %240 : vector<8x1xf32> to vector<8x128xf32>
    %242 = arith.cmpf oeq, %230, %241 : vector<8x128xf32>
    %c1073741824_i32_66 = arith.constant 1073741824 : i32
    %243 = vector.broadcast %c1073741824_i32_66 : i32 to vector<8x128xi32>
    %244 = arith.select %242, %17, %243 : vector<8x128xi1>, vector<8x128xi32>
    %cst_67 = arith.constant dense<2147483647> : vector<8xi32>
    %245 = vector.multi_reduction <minsi>, %244, %cst_67 [1] : vector<8x128xi32> to vector<8xi32>
    %246 = vector.shape_cast %245 : vector<8xi32> to vector<8x1xi32>
    %247 = arith.cmpf ole, %232, %240 : vector<8x1xf32>
    %248 = arith.select %247, %232, %240 : vector<8x1xi1>, vector<8x1xf32>
    %249 = arith.select %247, %238, %246 : vector<8x1xi1>, vector<8x1xi32>
    %c5_i32 = arith.constant 5 : i32
    %250 = vector.broadcast %c5_i32 : i32 to vector<8x128xi32>
    %251 = arith.cmpi eq, %18, %250 : vector<8x128xi32>
    %252 = vector.shape_cast %248 : vector<8x1xf32> to vector<8x1xf32>
    %253 = vector.broadcast %252 : vector<8x1xf32> to vector<8x128xf32>
    %254 = arith.select %251, %253, %212 : vector<8x128xi1>, vector<8x128xf32>
    %c5_i32_68 = arith.constant 5 : i32
    %255 = vector.broadcast %c5_i32_68 : i32 to vector<8x128xi32>
    %256 = arith.cmpi eq, %18, %255 : vector<8x128xi32>
    %257 = vector.shape_cast %249 : vector<8x1xi32> to vector<8x1xi32>
    %258 = vector.broadcast %257 : vector<8x1xi32> to vector<8x128xi32>
    %259 = arith.select %256, %258, %217 : vector<8x128xi1>, vector<8x128xi32>
    %260 = vector.broadcast %238 : vector<8x1xi32> to vector<8x128xi32>
    %261 = arith.cmpi eq, %11, %260 : vector<8x128xi32>
    %262 = vector.broadcast %247 : vector<8x1xi1> to vector<8x128xi1>
    %263 = arith.andi %262, %261 : vector<8x128xi1>
    %cst_69 = arith.constant 0x7F800000 : f32
    %264 = vector.broadcast %cst_69 : f32 to vector<8x128xf32>
    %265 = arith.select %263, %264, %223 : vector<8x128xi1>, vector<8x128xf32>
    %cst_70 = arith.constant dense<true> : vector<8x1xi1>
    %266 = arith.xori %247, %cst_70 : vector<8x1xi1>
    %267 = vector.broadcast %246 : vector<8x1xi32> to vector<8x128xi32>
    %268 = arith.cmpi eq, %17, %267 : vector<8x128xi32>
    %269 = vector.broadcast %266 : vector<8x1xi1> to vector<8x128xi1>
    %270 = arith.andi %269, %268 : vector<8x128xi1>
    %cst_71 = arith.constant 0x7F800000 : f32
    %271 = vector.broadcast %cst_71 : f32 to vector<8x128xf32>
    %272 = arith.select %270, %271, %230 : vector<8x128xi1>, vector<8x128xf32>
    %cst_72 = arith.constant dense<0x7F800000> : vector<8xf32>
    %273 = vector.multi_reduction <minimumf>, %265, %cst_72 [1] : vector<8x128xf32> to vector<8xf32>
    %274 = vector.shape_cast %273 : vector<8xf32> to vector<8x1xf32>
    %275 = vector.broadcast %274 : vector<8x1xf32> to vector<8x128xf32>
    %276 = arith.cmpf oeq, %265, %275 : vector<8x128xf32>
    %c1073741824_i32_73 = arith.constant 1073741824 : i32
    %277 = vector.broadcast %c1073741824_i32_73 : i32 to vector<8x128xi32>
    %278 = arith.select %276, %11, %277 : vector<8x128xi1>, vector<8x128xi32>
    %cst_74 = arith.constant dense<2147483647> : vector<8xi32>
    %279 = vector.multi_reduction <minsi>, %278, %cst_74 [1] : vector<8x128xi32> to vector<8xi32>
    %280 = vector.shape_cast %279 : vector<8xi32> to vector<8x1xi32>
    %cst_75 = arith.constant dense<0x7F800000> : vector<8xf32>
    %281 = vector.multi_reduction <minimumf>, %272, %cst_75 [1] : vector<8x128xf32> to vector<8xf32>
    %282 = vector.shape_cast %281 : vector<8xf32> to vector<8x1xf32>
    %283 = vector.broadcast %282 : vector<8x1xf32> to vector<8x128xf32>
    %284 = arith.cmpf oeq, %272, %283 : vector<8x128xf32>
    %c1073741824_i32_76 = arith.constant 1073741824 : i32
    %285 = vector.broadcast %c1073741824_i32_76 : i32 to vector<8x128xi32>
    %286 = arith.select %284, %17, %285 : vector<8x128xi1>, vector<8x128xi32>
    %cst_77 = arith.constant dense<2147483647> : vector<8xi32>
    %287 = vector.multi_reduction <minsi>, %286, %cst_77 [1] : vector<8x128xi32> to vector<8xi32>
    %288 = vector.shape_cast %287 : vector<8xi32> to vector<8x1xi32>
    %289 = arith.cmpf ole, %274, %282 : vector<8x1xf32>
    %290 = arith.select %289, %274, %282 : vector<8x1xi1>, vector<8x1xf32>
    %291 = arith.select %289, %280, %288 : vector<8x1xi1>, vector<8x1xi32>
    %c6_i32 = arith.constant 6 : i32
    %292 = vector.broadcast %c6_i32 : i32 to vector<8x128xi32>
    %293 = arith.cmpi eq, %18, %292 : vector<8x128xi32>
    %294 = vector.shape_cast %290 : vector<8x1xf32> to vector<8x1xf32>
    %295 = vector.broadcast %294 : vector<8x1xf32> to vector<8x128xf32>
    %296 = arith.select %293, %295, %254 : vector<8x128xi1>, vector<8x128xf32>
    %c6_i32_78 = arith.constant 6 : i32
    %297 = vector.broadcast %c6_i32_78 : i32 to vector<8x128xi32>
    %298 = arith.cmpi eq, %18, %297 : vector<8x128xi32>
    %299 = vector.shape_cast %291 : vector<8x1xi32> to vector<8x1xi32>
    %300 = vector.broadcast %299 : vector<8x1xi32> to vector<8x128xi32>
    %301 = arith.select %298, %300, %259 : vector<8x128xi1>, vector<8x128xi32>
    %302 = vector.broadcast %280 : vector<8x1xi32> to vector<8x128xi32>
    %303 = arith.cmpi eq, %11, %302 : vector<8x128xi32>
    %304 = vector.broadcast %289 : vector<8x1xi1> to vector<8x128xi1>
    %305 = arith.andi %304, %303 : vector<8x128xi1>
    %cst_79 = arith.constant 0x7F800000 : f32
    %306 = vector.broadcast %cst_79 : f32 to vector<8x128xf32>
    %307 = arith.select %305, %306, %265 : vector<8x128xi1>, vector<8x128xf32>
    %cst_80 = arith.constant dense<true> : vector<8x1xi1>
    %308 = arith.xori %289, %cst_80 : vector<8x1xi1>
    %309 = vector.broadcast %288 : vector<8x1xi32> to vector<8x128xi32>
    %310 = arith.cmpi eq, %17, %309 : vector<8x128xi32>
    %311 = vector.broadcast %308 : vector<8x1xi1> to vector<8x128xi1>
    %312 = arith.andi %311, %310 : vector<8x128xi1>
    %cst_81 = arith.constant 0x7F800000 : f32
    %313 = vector.broadcast %cst_81 : f32 to vector<8x128xf32>
    %314 = arith.select %312, %313, %272 : vector<8x128xi1>, vector<8x128xf32>
    %cst_82 = arith.constant dense<0x7F800000> : vector<8xf32>
    %315 = vector.multi_reduction <minimumf>, %307, %cst_82 [1] : vector<8x128xf32> to vector<8xf32>
    %316 = vector.shape_cast %315 : vector<8xf32> to vector<8x1xf32>
    %317 = vector.broadcast %316 : vector<8x1xf32> to vector<8x128xf32>
    %318 = arith.cmpf oeq, %307, %317 : vector<8x128xf32>
    %c1073741824_i32_83 = arith.constant 1073741824 : i32
    %319 = vector.broadcast %c1073741824_i32_83 : i32 to vector<8x128xi32>
    %320 = arith.select %318, %11, %319 : vector<8x128xi1>, vector<8x128xi32>
    %cst_84 = arith.constant dense<2147483647> : vector<8xi32>
    %321 = vector.multi_reduction <minsi>, %320, %cst_84 [1] : vector<8x128xi32> to vector<8xi32>
    %322 = vector.shape_cast %321 : vector<8xi32> to vector<8x1xi32>
    %cst_85 = arith.constant dense<0x7F800000> : vector<8xf32>
    %323 = vector.multi_reduction <minimumf>, %314, %cst_85 [1] : vector<8x128xf32> to vector<8xf32>
    %324 = vector.shape_cast %323 : vector<8xf32> to vector<8x1xf32>
    %325 = vector.broadcast %324 : vector<8x1xf32> to vector<8x128xf32>
    %326 = arith.cmpf oeq, %314, %325 : vector<8x128xf32>
    %c1073741824_i32_86 = arith.constant 1073741824 : i32
    %327 = vector.broadcast %c1073741824_i32_86 : i32 to vector<8x128xi32>
    %328 = arith.select %326, %17, %327 : vector<8x128xi1>, vector<8x128xi32>
    %cst_87 = arith.constant dense<2147483647> : vector<8xi32>
    %329 = vector.multi_reduction <minsi>, %328, %cst_87 [1] : vector<8x128xi32> to vector<8xi32>
    %330 = vector.shape_cast %329 : vector<8xi32> to vector<8x1xi32>
    %331 = arith.cmpf ole, %316, %324 : vector<8x1xf32>
    %332 = arith.select %331, %316, %324 : vector<8x1xi1>, vector<8x1xf32>
    %333 = arith.select %331, %322, %330 : vector<8x1xi1>, vector<8x1xi32>
    %c7_i32 = arith.constant 7 : i32
    %334 = vector.broadcast %c7_i32 : i32 to vector<8x128xi32>
    %335 = arith.cmpi eq, %18, %334 : vector<8x128xi32>
    %336 = vector.shape_cast %332 : vector<8x1xf32> to vector<8x1xf32>
    %337 = vector.broadcast %336 : vector<8x1xf32> to vector<8x128xf32>
    %338 = arith.select %335, %337, %296 : vector<8x128xi1>, vector<8x128xf32>
    %c7_i32_88 = arith.constant 7 : i32
    %339 = vector.broadcast %c7_i32_88 : i32 to vector<8x128xi32>
    %340 = arith.cmpi eq, %18, %339 : vector<8x128xi32>
    %341 = vector.shape_cast %333 : vector<8x1xi32> to vector<8x1xi32>
    %342 = vector.broadcast %341 : vector<8x1xi32> to vector<8x128xi32>
    %343 = arith.select %340, %342, %301 : vector<8x128xi1>, vector<8x128xi32>
    %c0_89 = arith.constant 0 : index
    %c0_90 = arith.constant 0 : index
    %344 = vector.load %arg5[%c0_89, %c0_90] : memref<8x128xf32, #tpu.memory_space<vmem>>, vector<8x128xf32>
    tpu.vector_store %arg5[%c0_89, %c0_90], %338 {strides = array<i32>} : memref<8x128xf32, #tpu.memory_space<vmem>>, vector<8x128xf32>,
    %c0_91 = arith.constant 0 : index
    %c0_92 = arith.constant 0 : index
    %345 = vector.load %arg6[%c0_91, %c0_92] : memref<8x128xi32, #tpu.memory_space<vmem>>, vector<8x128xi32>
    tpu.vector_store %arg6[%c0_91, %c0_92], %343 {strides = array<i32>} : memref<8x128xi32, #tpu.memory_space<vmem>>, vector<8x128xi32>,
    %c0_i32_93 = arith.constant 0 : i32
    %346 = arith.cmpi eq, %arg1, %c0_i32_93 : i32
    %347 = arith.extui %346 : i1 to i32
    %c0_i32_94 = arith.constant 0 : i32
    %348 = arith.cmpi ne, %347, %c0_i32_94 : i32
    scf.if %348 {
      %c0_95 = arith.constant 0 : index
      %c0_96 = arith.constant 0 : index
      %349 = vector.load %arg4[%c0_95, %c0_96] : memref<8x128xi32, #tpu.memory_space<vmem>>, vector<8x128xi32>
      tpu.vector_store %arg4[%c0_95, %c0_96], %343 {strides = array<i32>} : memref<8x128xi32, #tpu.memory_space<vmem>>, vector<8x128xi32>,
    } else {
    }
    return
  }
  func.func @transform_0(%arg0: i32, %arg1: i32) -> (i32, i32) {
    %c0_i32 = arith.constant 0 : i32
    %c0_i32_0 = arith.constant 0 : i32
    return %arg0, %c0_i32 : i32, i32
  }
  func.func @transform_1(%arg0: i32, %arg1: i32) -> (i32, i32) {
    %c0_i32 = arith.constant 0 : i32
    %c0_i32_0 = arith.constant 0 : i32
    return %c0_i32, %arg1 : i32, i32
  }
  func.func @transform_2(%arg0: i32, %arg1: i32) -> (i32, i32) {
    %c0_i32 = arith.constant 0 : i32
    %c0_i32_0 = arith.constant 0 : i32
    return %arg0, %c0_i32 : i32, i32
  }
}

module attributes {stable_mosaic.version = 11 : i64} {
  func.func @_gauss_embed_kernel(%arg0: i32, %arg1: memref<24x8xf32, #tpu.memory_space<vmem>>, %arg2: memref<8x128xf32, #tpu.memory_space<vmem>>, %arg3: memref<24x128xf32, #tpu.memory_space<vmem>>) attributes {dimension_semantics = [#tpu.dimension_semantics<parallel>], iteration_bounds = array<i64: 2>, scalar_prefetch = 0 : i64, scratch_operands = 0 : i64, tpu.core_type = #tpu.core_type<tc>, window_params = [{transform_indices = @transform_0, window_bounds = array<i64: 24, 8>}, {pipeline_mode = #tpu.pipeline_mode<synchronous>, transform_indices = @transform_1, window_bounds = array<i64: 8, 128>}, {transform_indices = @transform_2, window_bounds = array<i64: 24, 128>}]} {
    %c0 = arith.constant 0 : index
    %c0_0 = arith.constant 0 : index
    %0 = vector.load %arg1[%c0, %c0_0] : memref<24x8xf32, #tpu.memory_space<vmem>>, vector<24x8xf32>
    %c0_1 = arith.constant 0 : index
    %c0_2 = arith.constant 0 : index
    %1 = vector.load %arg2[%c0_1, %c0_2] : memref<8x128xf32, #tpu.memory_space<vmem>>, vector<8x128xf32>
    %cst = arith.constant dense<0.000000e+00> : vector<24x128xf32>
    %2 = tpu.matmul %0, %1, %cst {dimension_numbers = #tpu.dot_dimension_numbers<[1], [0], [0], [1], [0, 0, 1, 1], [], []>} : vector<24x8xf32>, vector<8x128xf32>, vector<24x128xf32> -> vector<24x128xf32>
    %3 = math.exp %2 : vector<24x128xf32>
    %4 = arith.cmpf one, %3, %3 : vector<24x128xf32>
    %cst_3 = arith.constant 0.000000e+00 : f32
    %5 = vector.broadcast %cst_3 : f32 to vector<24x128xf32>
    %6 = arith.select %4, %5, %3 : vector<24x128xi1>, vector<24x128xf32>
    %c0_4 = arith.constant 0 : index
    %c0_5 = arith.constant 0 : index
    %7 = vector.load %arg3[%c0_4, %c0_5] : memref<24x128xf32, #tpu.memory_space<vmem>>, vector<24x128xf32>
    tpu.vector_store %arg3[%c0_4, %c0_5], %6 {strides = array<i32>} : memref<24x128xf32, #tpu.memory_space<vmem>>, vector<24x128xf32>,
    %c0_i32 = arith.constant 0 : i32
    %8 = arith.cmpi eq, %arg0, %c0_i32 : i32
    %9 = arith.extui %8 : i1 to i32
    %c0_i32_6 = arith.constant 0 : i32
    %10 = arith.cmpi ne, %9, %c0_i32_6 : i32
    scf.if %10 {
      %11 = tpu.iota {dimensions = array<i32: 1>} : vector<1x128xi32>
      %c32_i32 = arith.constant 32 : i32
      %12 = vector.broadcast %c32_i32 : i32 to vector<1x128xi32>
      %13 = arith.cmpi slt, %11, %12 : vector<1x128xi32>
      %14 = vector.extract_strided_slice %6 {offsets = [0, 0], sizes = [1, 128], strides = [1, 1]} : vector<24x128xf32> to vector<1x128xf32>
      %cst_7 = arith.constant 0.000000e+00 : f32
      %15 = vector.broadcast %cst_7 : f32 to vector<1x128xf32>
      %16 = arith.select %13, %15, %14 : vector<1x128xi1>, vector<1x128xf32>
      %c0_8 = arith.constant 0 : index
      %c0_9 = arith.constant 0 : index
      %17 = vector.load %arg3[%c0_8, %c0_9] : memref<24x128xf32, #tpu.memory_space<vmem>>, vector<1x128xf32>
      tpu.vector_store %arg3[%c0_8, %c0_9], %16 {strides = array<i32>} : memref<24x128xf32, #tpu.memory_space<vmem>>, vector<1x128xf32>,
    } else {
    }
    return
  }
  func.func @transform_0(%arg0: i32) -> (i32, i32) {
    %c0_i32 = arith.constant 0 : i32
    %c0_i32_0 = arith.constant 0 : i32
    return %arg0, %c0_i32 : i32, i32
  }
  func.func @transform_1(%arg0: i32) -> (i32, i32) {
    %c0_i32 = arith.constant 0 : i32
    %c0_i32_0 = arith.constant 0 : i32
    %c0_i32_1 = arith.constant 0 : i32
    return %c0_i32, %c0_i32_0 : i32, i32
  }
  func.func @transform_2(%arg0: i32) -> (i32, i32) {
    %c0_i32 = arith.constant 0 : i32
    %c0_i32_0 = arith.constant 0 : i32
    return %arg0, %c0_i32 : i32, i32
  }
}

</mosaic_0001>

<llo_original>
// kernel: _device_forward.2
$region0: #{_device_forward.2}
  #allocation0 [shape = 'u32[]', space=smem, size = 0x4, offset = 0x4, fixed_abs, tag = 'smem constant byte address 0x4 - core index']
  #allocation1 [shape = 'u32[144,128]{1,0:T(1,128)}', space=vmem, size = 0x12000, scoped, tag = 'internal scratch']
  #allocation2 [shape = 'f32[8,128]{1,0:T(8,128)}', space=vmem, size = 0x1000, scoped, tag = 'scratch operand']
  #allocation3 [shape = 's32[8,128]{1,0:T(8,128)}', space=vmem, size = 0x1000, scoped, tag = 'scratch operand']
  %s0 = inlined_call_operand.vmem [shape: f32[16,8], index: 0, kind: input, shape index: {}]
  %s1 = inlined_call_operand.vmem [shape: f32[8,128], index: 1, kind: input, shape index: {}]
  %s2 = inlined_call_operand.vmem [shape: s32[16,128], index: 2, kind: output, shape index: {}]
  %s3 = sld [smem:[#allocation0]]
  $region49: #{_device_forward.2} parent=0
    _
  %s5 = ssub.s32 1, %s3
  %s6 = scalar_select 0, %s5, %s3
  loop: start=0, step=1, limit=4
  $region2: #{_device_forward.2} parent=0 // loop_pre_header
    _
  $region3: #{_device_forward.2} parent=0 // loop_header
    %s8 = sphi 0, %s12
    %p9 = scmp.ge.s32.totalorder %s8, 4
    %s15 = sphi 0, %s27
    %s16 = sphi 0, %s23
    %s17 = sphi 0, %s15
    %s18 = sphi 0, %s16
    %s19 = sphi 0, %s17
    %s20 = sphi 0, %s18
    %s30 = sphi 0, %s32
    %s33 = sphi 0, %s30
    %s34 = sphi 0, %s33
    %s50 = sphi 0, %s34
    %s56 = sphi 0, %s58
    %s59 = sphi 0, %s56
    %s60 = sphi 0, %s59
    %s76 = sphi 0, %s60
    %s82 = sphi 0, %s84
    %s85 = sphi 0, %s82
    %s86 = sphi 0, %s85
    %s102 = sphi 0, %s86
  $region4: #{_device_forward.2} parent=0 // loop_header_branch
    %11 = sbr.rel (%p9) target = $region8
  $region5: #{_device_forward.2} parent=0 // loop_body
    %s13 = ssub.s32 %s8, 1
    %s14 = ssub.s32 %s8, 2
    %s21 = sadd.s32 1, %s16
    %p22 = scmp.ge.s32.totalorder %s21, 1
    %s23 = scalar_select %p22, 0, %s21
    %s24 = sadd.s32 1, %s15
    %s25 = scalar_select %p22, %s24, %s15
    %p26 = scmp.ge.s32.totalorder %s25, 2
    %s27 = scalar_select %p26, 0, %s25
    %s28 = ssub.s32 %s15, %s27
    %p29 = scmp.eq.s32.totalorder %s28, 0
    %s31 = sadd.s32 %s30, 1
    %s32 = scalar_select %p29, %s30, %s31
    %p35 = pneg %p29
    %p36 = scmp.eq.s32.totalorder %s8, 1
    %p37 = por %p35, %p36
    %p38 = scmp.ne.s32.totalorder %s30, %s33
    %p39 = scmp.eq.s32.totalorder %s8, 0
    %p40 = por %p38, %p39
    %p41 = scmp.ne.s32.totalorder %s30, %s33
    %p42 = scmp.eq.s32.totalorder %s13, 1
    %p43 = por %p41, %p42
    %p44 = scmp.ne.s32.totalorder %s33, %s34
    %p45 = scmp.eq.s32.totalorder %s13, 0
    %p46 = por %p44, %p45
    %p47 = scmp.ne.s32.totalorder %s33, %s34
    %p48 = scmp.eq.s32.totalorder %s14, 1
    %p49 = por %p47, %p48
    %p51 = scmp.ne.s32.totalorder %s34, %s50
    %p52 = scmp.eq.s32.totalorder %s14, 0
    %p53 = por %p51, %p52
    %s54 = ssub.s32 %s16, %s23
    %p55 = scmp.eq.s32.totalorder %s54, 0
    %s57 = sadd.s32 %s56, 1
    %s58 = scalar_select %p55, %s56, %s57
    %p61 = pneg %p55
    %p62 = scmp.eq.s32.totalorder %s8, 1
    %p63 = por %p61, %p62
    %p64 = scmp.ne.s32.totalorder %s56, %s59
    %p65 = scmp.eq.s32.totalorder %s8, 0
    %p66 = por %p64, %p65
    %p67 = scmp.ne.s32.totalorder %s56, %s59
    %p68 = scmp.eq.s32.totalorder %s13, 1
    %p69 = por %p67, %p68
    %p70 = scmp.ne.s32.totalorder %s59, %s60
    %p71 = scmp.eq.s32.totalorder %s13, 0
    %p72 = por %p70, %p71
    %p73 = scmp.ne.s32.totalorder %s59, %s60
    %p74 = scmp.eq.s32.totalorder %s14, 1
    %p75 = por %p73, %p74
    %p77 = scmp.ne.s32.totalorder %s60, %s76
    %p78 = scmp.eq.s32.totalorder %s14, 0
    %p79 = por %p77, %p78
    %s80 = ssub.s32 %s15, %s27
    %p81 = scmp.eq.s32.totalorder %s80, 0
    %s83 = sadd.s32 %s82, 1
    %s84 = scalar_select %p81, %s82, %s83
    %p87 = pneg %p81
    %p88 = scmp.eq.s32.totalorder %s8, 1
    %p89 = por %p87, %p88
    %p90 = scmp.ne.s32.totalorder %s82, %s85
    %p91 = scmp.eq.s32.totalorder %s8, 0
    %p92 = por %p90, %p91
    %p93 = scmp.ne.s32.totalorder %s82, %s85
    %p94 = scmp.eq.s32.totalorder %s13, 1
    %p95 = por %p93, %p94
    %p96 = scmp.ne.s32.totalorder %s85, %s86
    %p97 = scmp.eq.s32.totalorder %s13, 0
    %p98 = por %p96, %p97
    %p99 = scmp.ne.s32.totalorder %s85, %s86
    %p100 = scmp.eq.s32.totalorder %s14, 1
    %p101 = por %p99, %p100
    %p103 = scmp.ne.s32.totalorder %s86, %s102
    %p104 = scmp.eq.s32.totalorder %s14, 0
    %p105 = por %p103, %p104
    %p106 = scmp.le.s32.totalorder 1, %s8
    %p107 = scmp.lt.s32.totalorder %s8, 3
    %p108 = pnand %p106, %p107
    %p109 = pneg %p108
    // Predicated region
    $region9: #{_device_forward.2} parent=5 // pred_check
      _
    $region10: #{_device_forward.2} parent=5 // pred_check_branch
      %111 = sbr.rel (%p108) target = $region12
    $region11: #{_device_forward.2} parent=5 // pred_region
      %s112 = ssub.s32 %s8, 1
      // Predicated region
      $region13: #{_device_forward.2} parent=11 // pred_check
        %p113 = pneg %p72
      $region14: #{_device_forward.2} parent=11 // pred_check_branch
        %115 = sbr.rel (%p113) target = $region16
      $region15: #{_device_forward.2} parent=11 // pred_region
        %p116 = scmp.lt.s32.totalorder %s18, 0
        %s117 = scalar_select %p116, %s18, 0
        %s118 = smul.addr %s117, 8
        %s119 = scalar_lea.vmem %s1, %s118
      $region16: #{_device_forward.2} parent=11 // pred_fallthru
        _
    $region12: #{_device_forward.2} parent=5 // pred_fallthru
      _
    %p120 = scmp.lt.s32.totalorder %s8, 2
    // Predicated region
    $region17: #{_device_forward.2} parent=5 // pred_check
      %p121 = pneg %p120
    $region18: #{_device_forward.2} parent=5 // pred_check_branch
      %123 = sbr.rel (%p121) target = $region20
    $region19: #{_device_forward.2} parent=5 // pred_region
      // Predicated region
      $region21: #{_device_forward.2} parent=19 // pred_check
        %p124 = pneg %p40
      $region22: #{_device_forward.2} parent=19 // pred_check_branch
        %126 = sbr.rel (%p124) target = $region24
      $region23: #{_device_forward.2} parent=19 // pred_region
        %p127 = scmp.lt.s32.totalorder %s15, 1
        %s128 = scalar_select %p127, %s15, 1
        %s129 = smul.addr %s128, 8
        %s130 = scalar_lea.vmem %s0, %s129
      $region24: #{_device_forward.2} parent=19 // pred_fallthru
        _
    $region20: #{_device_forward.2} parent=5 // pred_fallthru
      _
    %p131 = scmp.le.s32.totalorder 1, %s8
    %p132 = scmp.lt.s32.totalorder %s8, 3
    %p133 = pnand %p131, %p132
    %p134 = pneg %p133
    // Predicated region
    $region25: #{_device_forward.2} parent=5 // pred_check
      _
    $region26: #{_device_forward.2} parent=5 // pred_check_branch
      %136 = sbr.rel (%p133) target = $region28
    $region27: #{_device_forward.2} parent=5 // pred_region
      %s137 = ssub.s32 %s8, 1
      %p138 = scmp.lt.s32.totalorder %s17, 1
      %s139 = scalar_select %p138, %s17, 1
      %s140 = smul.addr %s139, 8
      %s141 = scalar_lea.vmem %s0, %s140
      %p142 = pneg %p46
      %p143 = pneg %p43
      %p144 = scmp.lt.s32.totalorder %s18, 0
      %s145 = scalar_select %p144, %s18, 0
      %s146 = smul.addr %s145, 8
      %s147 = scalar_lea.vmem %s1, %s146
      %p148 = pneg %p72
      %p149 = pneg %p69
      %p150 = pneg %p98
      %p151 = pneg %p95
      %p152 = scmp.lt.s32.totalorder %s17, 1
      %s153 = scalar_select %p152, %s17, 1
      %s154 = smul.addr %s153, 8
      %s155 = scalar_lea.vmem %s2, %s154
      %p156 = scmp.lt.s32.totalorder %s17, 1
      %s157 = scalar_select %p156, %s17, 1
      %s158 = smul.addr %s157, 8
      %s159 = scalar_lea.vmem %s0, %s158
      %p160 = scmp.lt.s32.totalorder %s18, 0
      %s161 = scalar_select %p160, %s18, 0
      %s162 = smul.addr %s161, 8
      %s163 = scalar_lea.vmem %s1, %s162
      %p164 = scmp.lt.s32.totalorder %s17, 1
      %s165 = scalar_select %p164, %s17, 1
      %s166 = smul.addr %s165, 8
      %s167 = scalar_lea.vmem %s2, %s166
      %p168 = scmp.eq.s32.totalorder %s18, 0
      // Predicated region
      $region29: #{_device_forward.2} parent=27 // pred_check
        %p169 = pneg %p168
      $region30: #{_device_forward.2} parent=27 // pred_check_branch
        %171 = sbr.rel (%p169) target = $region32
      $region31: #{_device_forward.2} parent=27 // pred_region
        %172 = vst [vmem:[#allocation2] sm:$0xff] inf
        %173 = vst [vmem:[#allocation3] sm:$0xff] 0
      $region32: #{_device_forward.2} parent=27 // pred_fallthru
        _
      %v174 = vld [vmem:[%s159] sm:$0xff]
      %v175 = vld [vmem:[%s163] sm:$0xff]
      %vm176 = vcmask 64512
      %v178 = vsel %vm176, %v174, 0
      %180 = vmatprep.subr.mxu0 0.0
      %181 = vmatpush1.msra.mxu0 %v175
      %182 = vmatprep.subr.mxu0 0.0
      %183 = vmatpush1.msra.mxu0 0.0
      %184 = vmatprep.subr.mxu0 0.0
      %185 = vmatpush1.msra.mxu0 0.0
      %186 = vmatprep.subr.mxu0 0.0
      %187 = vmatpush1.msra.mxu0 0.0
      %188 = vmatprep.subr.mxu0 0.0
      %189 = vmatpush1.msra.mxu0 0.0
      %190 = vmatprep.subr.mxu0 0.0
      %191 = vmatpush1.msra.mxu0 0.0
      %192 = vmatprep.subr.mxu0 0.0
      %193 = vmatpush1.msra.mxu0 0.0
      %194 = vmatprep.subr.mxu0 0.0
      %195 = vmatpush1.msra.mxu0 0.0
      %196 = vmatprep.subr.mxu0 0.0
      %197 = vmatpush1.msra.mxu0 0.0
      %198 = vmatprep.subr.mxu0 0.0
      %199 = vmatpush1.msra.mxu0 0.0
      %200 = vmatprep.subr.mxu0 0.0
      %201 = vmatpush1.msra.mxu0 0.0
      %202 = vmatprep.subr.mxu0 0.0
      %203 = vmatpush1.msra.mxu0 0.0
      %204 = vmatprep.subr.mxu0 0.0
      %205 = vmatpush1.msra.mxu0 0.0
      %206 = vmatprep.subr.mxu0 0.0
      %207 = vmatpush1.msra.mxu0 0.0
      %208 = vmatprep.subr.mxu0 0.0
      %209 = vmatpush1.msra.mxu0 0.0
      %210 = vmatprep.subr.mxu0 0.0
      %211 = vmatpush1.msra.mxu0 0.0
      %212 = vmatprep.subr.mxu0 0.0
      %213 = vmatpush1.msra.mxu0 0.0
      %214 = vmatprep.subr.mxu0 0.0
      %215 = vmatpush1.msra.mxu0 0.0
      %216 = vmatprep.subr.mxu0 0.0
      %217 = vmatpush1.msra.mxu0 0.0
      %218 = vmatprep.subr.mxu0 0.0
      %219 = vmatpush1.msra.mxu0 0.0
      %220 = vmatprep.subr.mxu0 0.0
      %221 = vmatpush1.msra.mxu0 0.0
      %222 = vmatprep.subr.mxu0 0.0
      %223 = vmatpush1.msra.mxu0 0.0
      %224 = vmatprep.subr.mxu0 0.0
      %225 = vmatpush1.msra.mxu0 0.0
      %226 = vmatprep.subr.mxu0 0.0
      %227 = vmatpush1.msra.mxu0 0.0
      %228 = vmatprep.subr.mxu0 0.0
      %229 = vmatpush1.msra.mxu0 0.0
      %230 = vmatprep.subr.mxu0 0.0
      %231 = vmatpush1.msra.mxu0 0.0
      %232 = vmatprep.subr.mxu0 0.0
      %233 = vmatpush1.msra.mxu0 0.0
      %234 = vmatprep.subr.mxu0 0.0
      %235 = vmatpush1.msra.mxu0 0.0
      %236 = vmatprep.subr.mxu0 0.0
      %237 = vmatpush1.msra.mxu0 0.0
      %238 = vmatprep.subr.mxu0 0.0
      %239 = vmatpush1.msra.mxu0 0.0
      %240 = vmatprep.subr.mxu0 0.0
      %241 = vmatpush1.msra.mxu0 0.0
      %242 = vmatprep.subr.mxu0 0.0
      %243 = vmatpush1.msra.mxu0 0.0
      %244 = vmatprep.mubr.f32.mxu0 0.0
      %245 = vmatmul.mubr.f32.gmra.mrb[0].mxu0 %v178
      %v246 = vpop.f32.mrb[0].mxu0
      %v247 = vadd.f32 0.0, %v246
      %v248 = vpop.f32.mrb[0].mxu0
      %249 = vdwg.mxu0
      %v250 = vmax.f32 %v247, 0.0
      %v251 = vlaneseq
      %v252 = vand.u32 %v251, 127
      %s253 = smul.u32 %s18, 128
      %v254 = vstv %s253
      %v255 = vadd.s32 %v252, %v254
      %vm256 = vcmp.lt.s32.totalorder %v255, 16
      %v257 = vsel %vm256, %v250, inf
      %v258 = vld [vmem:[#allocation2] sm:$0xff]
      %v259 = vld [vmem:[#allocation3] sm:$0xff]
      %260 = vmin.xlane.f32.xlu0 %v257
      %v261 = vpop.xlane.xlu0 %260
      %vm262 = vcmp.eq.f32.partialorder %v257, %v261
      %v263 = vsel %vm262, %v255, 1073741824
      %v264 = vand.u32 %v263, 65535
      %v265 = vshra.s32 %v263, 16
      %v266 = vcvt.s32.f32 %v264
      %v267 = vcvt.s32.f32 %v265
      %268 = vmin.xlane.f32.xlu0 %v267
      %v269 = vpop.xlane.xlu0 %268
      %vm270 = vcmp.eq.f32.partialorder %v267, %v269
      %v271 = vsel %vm270, %v266, inf
      %272 = vmin.xlane.f32.xlu0 %v271
      %v273 = vpop.xlane.xlu0 %272
      %v274 = vcvt.f32.s32 %v273
      %v275 = vcvt.f32.s32 %v269
      %v276 = vshll.u32 %v275, 16
      %v277 = vadd.s32 %v276, %v274
      %278 = vmin.xlane.f32.xlu0 %v258
      %v279 = vpop.xlane.xlu0 %278
      %vm280 = vcmp.eq.f32.partialorder %v258, %v279
      %v281 = vsel %vm280, %v259, 1073741824
      %v282 = vand.u32 %v281, 65535
      %v283 = vshra.s32 %v281, 16
      %v284 = vcvt.s32.f32 %v282
      %v285 = vcvt.s32.f32 %v283
      %286 = vmin.xlane.f32.xlu0 %v285
      %v287 = vpop.xlane.xlu0 %286
      %vm288 = vcmp.eq.f32.partialorder %v285, %v287
      %v289 = vsel %vm288, %v284, inf
      %290 = vmin.xlane.f32.xlu0 %v289
      %v291 = vpop.xlane.xlu0 %290
      %v292 = vcvt.f32.s32 %v291
      %v293 = vcvt.f32.s32 %v287
      %v294 = vshll.u32 %v293, 16
      %v295 = vadd.s32 %v294, %v292
      %vm296 = vcmp.le.f32.partialorder %v261, %v279
      %v297 = vsel %vm296, %v261, %v279
      %v298 = vsel %vm296, %v277, %v295
      %vm299 = vcmp.eq.s32.totalorder %v252, 0
      %v300 = vsel %vm299, %v297, inf
      %v301 = vsel %vm299, %v298, 0
      %vm302 = vcmp.eq.s32.totalorder %v255, %v277
      %v303 = vsel %vm296, 1, 0
      %vm304 = vcmp.eq.s32.totalorder %v303, 1
      %vm305 = vmand %vm304, %vm302
      %v306 = vsel %vm305, inf, %v257
      %vm307 = vmxor %vm296, 1
      %vm308 = vcmp.eq.s32.totalorder %v259, %v295
      %v309 = vsel %vm307, 1, 0
      %vm310 = vcmp.eq.s32.totalorder %v309, 1
      %vm311 = vmand %vm310, %vm308
      %v312 = vsel %vm311, inf, %v258
      %313 = vmin.xlane.f32.xlu0 %v306
      %v314 = vpop.xlane.xlu0 %313
      %vm315 = vcmp.eq.f32.partialorder %v306, %v314
      %v316 = vsel %vm315, %v255, 1073741824
      %v317 = vand.u32 %v316, 65535
      %v318 = vshra.s32 %v316, 16
      %v319 = vcvt.s32.f32 %v317
      %v320 = vcvt.s32.f32 %v318
      %321 = vmin.xlane.f32.xlu0 %v320
      %v322 = vpop.xlane.xlu0 %321
      %vm323 = vcmp.eq.f32.partialorder %v320, %v322
      %v324 = vsel %vm323, %v319, inf
      %325 = vmin.xlane.f32.xlu0 %v324
      %v326 = vpop.xlane.xlu0 %325
      %v327 = vcvt.f32.s32 %v326
      %v328 = vcvt.f32.s32 %v322
      %v329 = vshll.u32 %v328, 16
      %v330 = vadd.s32 %v329, %v327
      %331 = vmin.xlane.f32.xlu0 %v312
      %v332 = vpop.xlane.xlu0 %331
      %vm333 = vcmp.eq.f32.partialorder %v312, %v332
      %v334 = vsel %vm333, %v259, 1073741824
      %v335 = vand.u32 %v334, 65535
      %v336 = vshra.s32 %v334, 16
      %v337 = vcvt.s32.f32 %v335
      %v338 = vcvt.s32.f32 %v336
      %339 = vmin.xlane.f32.xlu0 %v338
      %v340 = vpop.xlane.xlu0 %339
      %vm341 = vcmp.eq.f32.partialorder %v338, %v340
      %v342 = vsel %vm341, %v337, inf
      %343 = vmin.xlane.f32.xlu0 %v342
      %v344 = vpop.xlane.xlu0 %343
      %v345 = vcvt.f32.s32 %v344
      %v346 = vcvt.f32.s32 %v340
      %v347 = vshll.u32 %v346, 16
      %v348 = vadd.s32 %v347, %v345
      %vm349 = vcmp.le.f32.partialorder %v314, %v332
      %v350 = vsel %vm349, %v314, %v332
      %v351 = vsel %vm349, %v330, %v348
      %vm352 = vcmp.eq.s32.totalorder %v252, 1
      %v353 = vsel %vm352, %v350, %v300
      %v354 = vsel %vm352, %v351, %v301
      %vm355 = vcmp.eq.s32.totalorder %v255, %v330
      %v356 = vsel %vm349, 1, 0
      %vm357 = vcmp.eq.s32.totalorder %v356, 1
      %vm358 = vmand %vm357, %vm355
      %v359 = vsel %vm358, inf, %v306
      %vm360 = vmxor %vm349, 1
      %vm361 = vcmp.eq.s32.totalorder %v259, %v348
      %v362 = vsel %vm360, 1, 0
      %vm363 = vcmp.eq.s32.totalorder %v362, 1
      %vm364 = vmand %vm363, %vm361
      %v365 = vsel %vm364, inf, %v312
      %366 = vmin.xlane.f32.xlu0 %v359
      %v367 = vpop.xlane.xlu0 %366
      %vm368 = vcmp.eq.f32.partialorder %v359, %v367
      %v369 = vsel %vm368, %v255, 1073741824
      %v370 = vand.u32 %v369, 65535
      %v371 = vshra.s32 %v369, 16
      %v372 = vcvt.s32.f32 %v370
      %v373 = vcvt.s32.f32 %v371
      %374 = vmin.xlane.f32.xlu0 %v373
      %v375 = vpop.xlane.xlu0 %374
      %vm376 = vcmp.eq.f32.partialorder %v373, %v375
      %v377 = vsel %vm376, %v372, inf
      %378 = vmin.xlane.f32.xlu0 %v377
      %v379 = vpop.xlane.xlu0 %378
      %v380 = vcvt.f32.s32 %v379
      %v381 = vcvt.f32.s32 %v375
      %v382 = vshll.u32 %v381, 16
      %v383 = vadd.s32 %v382, %v380
      %384 = vmin.xlane.f32.xlu0 %v365
      %v385 = vpop.xlane.xlu0 %384
      %vm386 = vcmp.eq.f32.partialorder %v365, %v385
      %v387 = vsel %vm386, %v259, 1073741824
      %v388 = vand.u32 %v387, 65535
      %v389 = vshra.s32 %v387, 16
      %v390 = vcvt.s32.f32 %v388
      %v391 = vcvt.s32.f32 %v389
      %392 = vmin.xlane.f32.xlu0 %v391
      %v393 = vpop.xlane.xlu0 %392
      %vm394 = vcmp.eq.f32.partialorder %v391, %v393
      %v395 = vsel %vm394, %v390, inf
      %396 = vmin.xlane.f32.xlu0 %v395
      %v397 = vpop.xlane.xlu0 %396
      %v398 = vcvt.f32.s32 %v397
      %v399 = vcvt.f32.s32 %v393
      %v400 = vshll.u32 %v399, 16
      %v401 = vadd.s32 %v400, %v398
      %vm402 = vcmp.le.f32.partialorder %v367, %v385
      %v403 = vsel %vm402, %v367, %v385
      %v404 = vsel %vm402, %v383, %v401
      %vm405 = vcmp.eq.s32.totalorder %v252, 2
      %v406 = vsel %vm405, %v403, %v353
      %v407 = vsel %vm405, %v404, %v354
      %vm408 = vcmp.eq.s32.totalorder %v255, %v383
      %v409 = vsel %vm402, 1, 0
      %vm410 = vcmp.eq.s32.totalorder %v409, 1
      %vm411 = vmand %vm410, %vm408
      %v412 = vsel %vm411, inf, %v359
      %vm413 = vmxor %vm402, 1
      %vm414 = vcmp.eq.s32.totalorder %v259, %v401
      %v415 = vsel %vm413, 1, 0
      %vm416 = vcmp.eq.s32.totalorder %v415, 1
      %vm417 = vmand %vm416, %vm414
      %v418 = vsel %vm417, inf, %v365
      %419 = vmin.xlane.f32.xlu0 %v412
      %v420 = vpop.xlane.xlu0 %419
      %vm421 = vcmp.eq.f32.partialorder %v412, %v420
      %v422 = vsel %vm421, %v255, 1073741824
      %v423 = vand.u32 %v422, 65535
      %v424 = vshra.s32 %v422, 16
      %v425 = vcvt.s32.f32 %v423
      %v426 = vcvt.s32.f32 %v424
      %427 = vmin.xlane.f32.xlu0 %v426
      %v428 = vpop.xlane.xlu0 %427
      %vm429 = vcmp.eq.f32.partialorder %v426, %v428
      %v430 = vsel %vm429, %v425, inf
      %431 = vmin.xlane.f32.xlu0 %v430
      %v432 = vpop.xlane.xlu0 %431
      %v433 = vcvt.f32.s32 %v432
      %v434 = vcvt.f32.s32 %v428
      %v435 = vshll.u32 %v434, 16
      %v436 = vadd.s32 %v435, %v433
      %437 = vmin.xlane.f32.xlu0 %v418
      %v438 = vpop.xlane.xlu0 %437
      %vm439 = vcmp.eq.f32.partialorder %v418, %v438
      %v440 = vsel %vm439, %v259, 1073741824
      %v441 = vand.u32 %v440, 65535
      %v442 = vshra.s32 %v440, 16
      %v443 = vcvt.s32.f32 %v441
      %v444 = vcvt.s32.f32 %v442
      %445 = vmin.xlane.f32.xlu0 %v444
      %v446 = vpop.xlane.xlu0 %445
      %vm447 = vcmp.eq.f32.partialorder %v444, %v446
      %v448 = vsel %vm447, %v443, inf
      %449 = vmin.xlane.f32.xlu0 %v448
      %v450 = vpop.xlane.xlu0 %449
      %v451 = vcvt.f32.s32 %v450
      %v452 = vcvt.f32.s32 %v446
      %v453 = vshll.u32 %v452, 16
      %v454 = vadd.s32 %v453, %v451
      %vm455 = vcmp.le.f32.partialorder %v420, %v438
      %v456 = vsel %vm455, %v420, %v438
      %v457 = vsel %vm455, %v436, %v454
      %vm458 = vcmp.eq.s32.totalorder %v252, 3
      %v459 = vsel %vm458, %v456, %v406
      %v460 = vsel %vm458, %v457, %v407
      %vm461 = vcmp.eq.s32.totalorder %v255, %v436
      %v462 = vsel %vm455, 1, 0
      %vm463 = vcmp.eq.s32.totalorder %v462, 1
      %vm464 = vmand %vm463, %vm461
      %v465 = vsel %vm464, inf, %v412
      %vm466 = vmxor %vm455, 1
      %vm467 = vcmp.eq.s32.totalorder %v259, %v454
      %v468 = vsel %vm466, 1, 0
      %vm469 = vcmp.eq.s32.totalorder %v468, 1
      %vm470 = vmand %vm469, %vm467
      %v471 = vsel %vm470, inf, %v418
      %472 = vmin.xlane.f32.xlu0 %v465
      %v473 = vpop.xlane.xlu0 %472
      %vm474 = vcmp.eq.f32.partialorder %v465, %v473
      %v475 = vsel %vm474, %v255, 1073741824
      %v476 = vand.u32 %v475, 65535
      %v477 = vshra.s32 %v475, 16
      %v478 = vcvt.s32.f32 %v476
      %v479 = vcvt.s32.f32 %v477
      %480 = vmin.xlane.f32.xlu0 %v479
      %v481 = vpop.xlane.xlu0 %480
      %vm482 = vcmp.eq.f32.partialorder %v479, %v481
      %v483 = vsel %vm482, %v478, inf
      %484 = vmin.xlane.f32.xlu0 %v483
      %v485 = vpop.xlane.xlu0 %484
      %v486 = vcvt.f32.s32 %v485
      %v487 = vcvt.f32.s32 %v481
      %v488 = vshll.u32 %v487, 16
      %v489 = vadd.s32 %v488, %v486
      %490 = vmin.xlane.f32.xlu0 %v471
      %v491 = vpop.xlane.xlu0 %490
      %vm492 = vcmp.eq.f32.partialorder %v471, %v491
      %v493 = vsel %vm492, %v259, 1073741824
      %v494 = vand.u32 %v493, 65535
      %v495 = vshra.s32 %v493, 16
      %v496 = vcvt.s32.f32 %v494
      %v497 = vcvt.s32.f32 %v495
      %498 = vmin.xlane.f32.xlu0 %v497
      %v499 = vpop.xlane.xlu0 %498
      %vm500 = vcmp.eq.f32.partialorder %v497, %v499
      %v501 = vsel %vm500, %v496, inf
      %502 = vmin.xlane.f32.xlu0 %v501
      %v503 = vpop.xlane.xlu0 %502
      %v504 = vcvt.f32.s32 %v503
      %v505 = vcvt.f32.s32 %v499
      %v506 = vshll.u32 %v505, 16
      %v507 = vadd.s32 %v506, %v504
      %vm508 = vcmp.le.f32.partialorder %v473, %v491
      %v509 = vsel %vm508, %v473, %v491
      %v510 = vsel %vm508, %v489, %v507
      %vm511 = vcmp.eq.s32.totalorder %v252, 4
      %v512 = vsel %vm511, %v509, %v459
      %v513 = vsel %vm511, %v510, %v460
      %vm514 = vcmp.eq.s32.totalorder %v255, %v489
      %v515 = vsel %vm508, 1, 0
      %vm516 = vcmp.eq.s32.totalorder %v515, 1
      %vm517 = vmand %vm516, %vm514
      %v518 = vsel %vm517, inf, %v465
      %vm519 = vmxor %vm508, 1
      %vm520 = vcmp.eq.s32.totalorder %v259, %v507
      %v521 = vsel %vm519, 1, 0
      %vm522 = vcmp.eq.s32.totalorder %v521, 1
      %vm523 = vmand %vm522, %vm520
      %v524 = vsel %vm523, inf, %v471
      %525 = vmin.xlane.f32.xlu0 %v518
      %v526 = vpop.xlane.xlu0 %525
      %vm527 = vcmp.eq.f32.partialorder %v518, %v526
      %v528 = vsel %vm527, %v255, 1073741824
      %v529 = vand.u32 %v528, 65535
      %v530 = vshra.s32 %v528, 16
      %v531 = vcvt.s32.f32 %v529
      %v532 = vcvt.s32.f32 %v530
      %533 = vmin.xlane.f32.xlu0 %v532
      %v534 = vpop.xlane.xlu0 %533
      %vm535 = vcmp.eq.f32.partialorder %v532, %v534
      %v536 = vsel %vm535, %v531, inf
      %537 = vmin.xlane.f32.xlu0 %v536
      %v538 = vpop.xlane.xlu0 %537
      %v539 = vcvt.f32.s32 %v538
      %v540 = vcvt.f32.s32 %v534
      %v541 = vshll.u32 %v540, 16
      %v542 = vadd.s32 %v541, %v539
      %543 = vmin.xlane.f32.xlu0 %v524
      %v544 = vpop.xlane.xlu0 %543
      %vm545 = vcmp.eq.f32.partialorder %v524, %v544
      %v546 = vsel %vm545, %v259, 1073741824
      %v547 = vand.u32 %v546, 65535
      %v548 = vshra.s32 %v546, 16
      %v549 = vcvt.s32.f32 %v547
      %v550 = vcvt.s32.f32 %v548
      %551 = vmin.xlane.f32.xlu0 %v550
      %v552 = vpop.xlane.xlu0 %551
      %vm553 = vcmp.eq.f32.partialorder %v550, %v552
      %v554 = vsel %vm553, %v549, inf
      %555 = vmin.xlane.f32.xlu0 %v554
      %v556 = vpop.xlane.xlu0 %555
      %v557 = vcvt.f32.s32 %v556
      %v558 = vcvt.f32.s32 %v552
      %v559 = vshll.u32 %v558, 16
      %v560 = vadd.s32 %v559, %v557
      %vm561 = vcmp.le.f32.partialorder %v526, %v544
      %v562 = vsel %vm561, %v526, %v544
      %v563 = vsel %vm561, %v542, %v560
      %vm564 = vcmp.eq.s32.totalorder %v252, 5
      %v565 = vsel %vm564, %v562, %v512
      %v566 = vsel %vm564, %v563, %v513
      %vm567 = vcmp.eq.s32.totalorder %v255, %v542
      %v568 = vsel %vm561, 1, 0
      %vm569 = vcmp.eq.s32.totalorder %v568, 1
      %vm570 = vmand %vm569, %vm567
      %v571 = vsel %vm570, inf, %v518
      %vm572 = vmxor %vm561, 1
      %vm573 = vcmp.eq.s32.totalorder %v259, %v560
      %v574 = vsel %vm572, 1, 0
      %vm575 = vcmp.eq.s32.totalorder %v574, 1
      %vm576 = vmand %vm575, %vm573
      %v577 = vsel %vm576, inf, %v524
      %578 = vmin.xlane.f32.xlu0 %v571
      %v579 = vpop.xlane.xlu0 %578
      %vm580 = vcmp.eq.f32.partialorder %v571, %v579
      %v581 = vsel %vm580, %v255, 1073741824
      %v582 = vand.u32 %v581, 65535
      %v583 = vshra.s32 %v581, 16
      %v584 = vcvt.s32.f32 %v582
      %v585 = vcvt.s32.f32 %v583
      %586 = vmin.xlane.f32.xlu0 %v585
      %v587 = vpop.xlane.xlu0 %586
      %vm588 = vcmp.eq.f32.partialorder %v585, %v587
      %v589 = vsel %vm588, %v584, inf
      %590 = vmin.xlane.f32.xlu0 %v589
      %v591 = vpop.xlane.xlu0 %590
      %v592 = vcvt.f32.s32 %v591
      %v593 = vcvt.f32.s32 %v587
      %v594 = vshll.u32 %v593, 16
      %v595 = vadd.s32 %v594, %v592
      %596 = vmin.xlane.f32.xlu0 %v577
      %v597 = vpop.xlane.xlu0 %596
      %vm598 = vcmp.eq.f32.partialorder %v577, %v597
      %v599 = vsel %vm598, %v259, 1073741824
      %v600 = vand.u32 %v599, 65535
      %v601 = vshra.s32 %v599, 16
      %v602 = vcvt.s32.f32 %v600
      %v603 = vcvt.s32.f32 %v601
      %604 = vmin.xlane.f32.xlu0 %v603
      %v605 = vpop.xlane.xlu0 %604
      %vm606 = vcmp.eq.f32.partialorder %v603, %v605
      %v607 = vsel %vm606, %v602, inf
      %608 = vmin.xlane.f32.xlu0 %v607
      %v609 = vpop.xlane.xlu0 %608
      %v610 = vcvt.f32.s32 %v609
      %v611 = vcvt.f32.s32 %v605
      %v612 = vshll.u32 %v611, 16
      %v613 = vadd.s32 %v612, %v610
      %vm614 = vcmp.le.f32.partialorder %v579, %v597
      %v615 = vsel %vm614, %v579, %v597
      %v616 = vsel %vm614, %v595, %v613
      %vm617 = vcmp.eq.s32.totalorder %v252, 6
      %v618 = vsel %vm617, %v615, %v565
      %v619 = vsel %vm617, %v616, %v566
      %vm620 = vcmp.eq.s32.totalorder %v255, %v595
      %v621 = vsel %vm614, 1, 0
      %vm622 = vcmp.eq.s32.totalorder %v621, 1
      %vm623 = vmand %vm622, %vm620
      %v624 = vsel %vm623, inf, %v571
      %vm625 = vmxor %vm614, 1
      %vm626 = vcmp.eq.s32.totalorder %v259, %v613
      %v627 = vsel %vm625, 1, 0
      %vm628 = vcmp.eq.s32.totalorder %v627, 1
      %vm629 = vmand %vm628, %vm626
      %v630 = vsel %vm629, inf, %v577
      %631 = vmin.xlane.f32.xlu0 %v624
      %v632 = vpop.xlane.xlu0 %631
      %vm633 = vcmp.eq.f32.partialorder %v624, %v632
      %v634 = vsel %vm633, %v255, 1073741824
      %v635 = vand.u32 %v634, 65535
      %v636 = vshra.s32 %v634, 16
      %v637 = vcvt.s32.f32 %v635
      %v638 = vcvt.s32.f32 %v636
      %639 = vmin.xlane.f32.xlu0 %v638
      %v640 = vpop.xlane.xlu0 %639
      %vm641 = vcmp.eq.f32.partialorder %v638, %v640
      %v642 = vsel %vm641, %v637, inf
      %643 = vmin.xlane.f32.xlu0 %v642
      %v644 = vpop.xlane.xlu0 %643
      %v645 = vcvt.f32.s32 %v644
      %v646 = vcvt.f32.s32 %v640
      %v647 = vshll.u32 %v646, 16
      %v648 = vadd.s32 %v647, %v645
      %649 = vmin.xlane.f32.xlu0 %v630
      %v650 = vpop.xlane.xlu0 %649
      %vm651 = vcmp.eq.f32.partialorder %v630, %v650
      %v652 = vsel %vm651, %v259, 1073741824
      %v653 = vand.u32 %v652, 65535
      %v654 = vshra.s32 %v652, 16
      %v655 = vcvt.s32.f32 %v653
      %v656 = vcvt.s32.f32 %v654
      %657 = vmin.xlane.f32.xlu0 %v656
      %v658 = vpop.xlane.xlu0 %657
      %vm659 = vcmp.eq.f32.partialorder %v656, %v658
      %v660 = vsel %vm659, %v655, inf
      %661 = vmin.xlane.f32.xlu0 %v660
      %v662 = vpop.xlane.xlu0 %661
      %v663 = vcvt.f32.s32 %v662
      %v664 = vcvt.f32.s32 %v658
      %v665 = vshll.u32 %v664, 16
      %v666 = vadd.s32 %v665, %v663
      %vm667 = vcmp.le.f32.partialorder %v632, %v650
      %v668 = vsel %vm667, %v632, %v650
      %v669 = vsel %vm667, %v648, %v666
      %vm670 = vcmp.eq.s32.totalorder %v252, 7
      %v671 = vsel %vm670, %v668, %v618
      %v672 = vsel %vm670, %v669, %v619
      %673 = vst [vmem:[#allocation2] sm:$0xff] %v671
      %674 = vst [vmem:[#allocation3] sm:$0xff] %v672
      // Predicated region
      $region33: #{_device_forward.2} parent=27 // pred_check
        %p675 = pneg %p168
      $region34: #{_device_forward.2} parent=27 // pred_check_branch
        %677 = sbr.rel (%p675) target = $region36
      $region35: #{_device_forward.2} parent=27 // pred_region
        %678 = vst [vmem:[%s167] sm:$0xff] %v672
      $region36: #{_device_forward.2} parent=27 // pred_fallthru
        _
      %p679 = scmp.lt.s32.totalorder %s17, 1
      %s680 = scalar_select %p679, %s17, 1
      %s681 = smul.addr %s680, 8
      %s682 = scalar_lea.vmem %s2, %s681
      // Predicated region
      $region37: #{_device_forward.2} parent=27 // pred_check
        %p683 = pneg %p95
      $region38: #{_device_forward.2} parent=27 // pred_check_branch
        %685 = sbr.rel (%p683) target = $region40
      $region39: #{_device_forward.2} parent=27 // pred_region
        _
      $region40: #{_device_forward.2} parent=27 // pred_fallthru
        _
    $region28: #{_device_forward.2} parent=5 // pred_fallthru
      _
    %p686 = scmp.le.s32.totalorder 2, %s8
    // Predicated region
    $region41: #{_device_forward.2} parent=5 // pred_check
      %p687 = pneg %p686
    $region42: #{_device_forward.2} parent=5 // pred_check_branch
      %689 = sbr.rel (%p687) target = $region44
    $region43: #{_device_forward.2} parent=5 // pred_region
      %s690 = ssub.s32 %s8, 2
      // Predicated region
      $region45: #{_device_forward.2} parent=43 // pred_check
        %p691 = pneg %p101
      $region46: #{_device_forward.2} parent=43 // pred_check_branch
        %693 = sbr.rel (%p691) target = $region48
      $region47: #{_device_forward.2} parent=43 // pred_region
        %p694 = scmp.lt.s32.totalorder %s19, 1
        %s695 = scalar_select %p694, %s19, 1
        %s696 = smul.addr %s695, 8
        %s697 = scalar_lea.vmem %s2, %s696
      $region48: #{_device_forward.2} parent=43 // pred_fallthru
        _
    $region44: #{_device_forward.2} parent=5 // pred_fallthru
      _
  $region6: #{_device_forward.2} parent=0 // loop_footer
    %s12 = sadd.s32 1, %s8
  $region7: #{_device_forward.2} parent=0 // loop_footer_branch
    %7 = sbr.rel target = $region3
  $region8: #{_device_forward.2} parent=0 // loop_exit
    _

// kernel: _device_forward.3
$region0: #{_device_forward.3}
  #allocation0 [shape = 'u32[]', space=smem, size = 0x4, offset = 0x4, fixed_abs, tag = 'smem constant byte address 0x4 - core index']
  #allocation1 [shape = 'u32[144,128]{1,0:T(1,128)}', space=vmem, size = 0x12000, scoped, tag = 'internal scratch']
  %s0 = inlined_call_operand.vmem [shape: f32[48,8], index: 0, kind: input, shape index: {}]
  %s1 = inlined_call_operand.vmem [shape: f32[8,128], index: 1, kind: input, shape index: {}]
  %s2 = inlined_call_operand.vmem [shape: f32[48,128], index: 2, kind: output, shape index: {}]
  %s3 = sld [smem:[#allocation0]]
  $region45: #{_device_forward.3} parent=0
    _
  %s5 = ssub.s32 1, %s3
  %s6 = scalar_select 0, %s5, %s3
  loop: start=0, step=1, limit=4
  $region2: #{_device_forward.3} parent=0 // loop_pre_header
    _
  $region3: #{_device_forward.3} parent=0 // loop_header
    %s8 = sphi 0, %s12
    %p9 = scmp.ge.s32.totalorder %s8, 4
    %s18 = sphi 0, %s20
    %s21 = sphi 0, %s18
    %s22 = sphi 0, %s21
    %s38 = sphi 0, %s22
    %s42 = sphi 0, %s42
    %s44 = sphi 0, %s42
    %s45 = sphi 0, %s44
    %s59 = sphi 0, %s45
    %s65 = sphi 0, %s67
    %s68 = sphi 0, %s65
    %s69 = sphi 0, %s68
    %s85 = sphi 0, %s69
  $region4: #{_device_forward.3} parent=0 // loop_header_branch
    %11 = sbr.rel (%p9) target = $region8
  $region5: #{_device_forward.3} parent=0 // loop_body
    %s13 = ssub.s32 %s8, 1
    %s14 = ssub.s32 %s8, 2
    %s15 = sadd.s32 %s8, 1
    %s16 = ssub.s32 %s8, %s15
    %p17 = scmp.eq.s32.totalorder %s16, 0
    %s19 = sadd.s32 %s18, 1
    %s20 = scalar_select %p17, %s18, %s19
    %p23 = pneg %p17
    %p24 = scmp.eq.s32.totalorder %s8, 1
    %p25 = por %p23, %p24
    %p26 = scmp.ne.s32.totalorder %s18, %s21
    %p27 = scmp.eq.s32.totalorder %s8, 0
    %p28 = por %p26, %p27
    %p29 = scmp.ne.s32.totalorder %s18, %s21
    %p30 = scmp.eq.s32.totalorder %s13, 1
    %p31 = por %p29, %p30
    %p32 = scmp.ne.s32.totalorder %s21, %s22
    %p33 = scmp.eq.s32.totalorder %s13, 0
    %p34 = por %p32, %p33
    %p35 = scmp.ne.s32.totalorder %s21, %s22
    %p36 = scmp.eq.s32.totalorder %s14, 1
    %p37 = por %p35, %p36
    %p39 = scmp.ne.s32.totalorder %s22, %s38
    %p40 = scmp.eq.s32.totalorder %s14, 0
    %p41 = por %p39, %p40
    %s43 = sadd.s32 %s42, 1
    %p46 = scmp.eq.s32.totalorder %s8, 1
    %p47 = scmp.ne.s32.totalorder %s42, %s44
    %p48 = scmp.eq.s32.totalorder %s8, 0
    %p49 = por %p47, %p48
    %p50 = scmp.ne.s32.totalorder %s42, %s44
    %p51 = scmp.eq.s32.totalorder %s13, 1
    %p52 = por %p50, %p51
    %p53 = scmp.ne.s32.totalorder %s44, %s45
    %p54 = scmp.eq.s32.totalorder %s13, 0
    %p55 = por %p53, %p54
    %p56 = scmp.ne.s32.totalorder %s44, %s45
    %p57 = scmp.eq.s32.totalorder %s14, 1
    %p58 = por %p56, %p57
    %p60 = scmp.ne.s32.totalorder %s45, %s59
    %p61 = scmp.eq.s32.totalorder %s14, 0
    %p62 = por %p60, %p61
    %s63 = ssub.s32 %s8, %s15
    %p64 = scmp.eq.s32.totalorder %s63, 0
    %s66 = sadd.s32 %s65, 1
    %s67 = scalar_select %p64, %s65, %s66
    %p70 = pneg %p64
    %p71 = scmp.eq.s32.totalorder %s8, 1
    %p72 = por %p70, %p71
    %p73 = scmp.ne.s32.totalorder %s65, %s68
    %p74 = scmp.eq.s32.totalorder %s8, 0
    %p75 = por %p73, %p74
    %p76 = scmp.ne.s32.totalorder %s65, %s68
    %p77 = scmp.eq.s32.totalorder %s13, 1
    %p78 = por %p76, %p77
    %p79 = scmp.ne.s32.totalorder %s68, %s69
    %p80 = scmp.eq.s32.totalorder %s13, 0
    %p81 = por %p79, %p80
    %p82 = scmp.ne.s32.totalorder %s68, %s69
    %p83 = scmp.eq.s32.totalorder %s14, 1
    %p84 = por %p82, %p83
    %p86 = scmp.ne.s32.totalorder %s69, %s85
    %p87 = scmp.eq.s32.totalorder %s14, 0
    %p88 = por %p86, %p87
    %p89 = scmp.le.s32.totalorder 1, %s8
    %p90 = scmp.lt.s32.totalorder %s8, 3
    %p91 = pnand %p89, %p90
    %p92 = pneg %p91
    // Predicated region
    $region9: #{_device_forward.3} parent=5 // pred_check
      _
    $region10: #{_device_forward.3} parent=5 // pred_check_branch
      %94 = sbr.rel (%p91) target = $region12
    $region11: #{_device_forward.3} parent=5 // pred_region
      %s95 = ssub.s32 %s8, 1
      // Predicated region
      $region13: #{_device_forward.3} parent=11 // pred_check
        %p96 = pneg %p55
      $region14: #{_device_forward.3} parent=11 // pred_check_branch
        %98 = sbr.rel (%p96) target = $region16
      $region15: #{_device_forward.3} parent=11 // pred_region
        _
      $region16: #{_device_forward.3} parent=11 // pred_fallthru
        _
    $region12: #{_device_forward.3} parent=5 // pred_fallthru
      _
    %p99 = scmp.lt.s32.totalorder %s8, 2
    // Predicated region
    $region17: #{_device_forward.3} parent=5 // pred_check
      %p100 = pneg %p99
    $region18: #{_device_forward.3} parent=5 // pred_check_branch
      %102 = sbr.rel (%p100) target = $region20
    $region19: #{_device_forward.3} parent=5 // pred_region
      // Predicated region
      $region21: #{_device_forward.3} parent=19 // pred_check
        %p103 = pneg %p28
      $region22: #{_device_forward.3} parent=19 // pred_check_branch
        %105 = sbr.rel (%p103) target = $region24
      $region23: #{_device_forward.3} parent=19 // pred_region
        %s106 = smul.u32 3, %s8
        %p107 = scmp.lt.s32.totalorder %s106, 5
        %s108 = scalar_select %p107, %s106, 5
        %s109 = smul.addr %s108, 8
        %s110 = scalar_lea.vmem %s0, %s109
        %s111 = smul.u32 3, %s8
      $region24: #{_device_forward.3} parent=19 // pred_fallthru
        _
    $region20: #{_device_forward.3} parent=5 // pred_fallthru
      _
    %p112 = scmp.le.s32.totalorder 1, %s8
    %p113 = scmp.lt.s32.totalorder %s8, 3
    %p114 = pnand %p112, %p113
    %p115 = pneg %p114
    // Predicated region
    $region25: #{_device_forward.3} parent=5 // pred_check
      _
    $region26: #{_device_forward.3} parent=5 // pred_check_branch
      %117 = sbr.rel (%p114) target = $region28
    $region27: #{_device_forward.3} parent=5 // pred_region
      %s118 = ssub.s32 %s8, 1
      %s119 = smul.u32 3, %s13
      %p120 = scmp.lt.s32.totalorder %s119, 5
      %s121 = scalar_select %p120, %s119, 5
      %s122 = smul.addr %s121, 8
      %s123 = scalar_lea.vmem %s0, %s122
      %p124 = pneg %p34
      %p125 = pneg %p31
      %p126 = pneg %p55
      %p127 = pneg %p52
      %p128 = pneg %p81
      %p129 = pneg %p78
      %s130 = smul.u32 3, %s13
      %p131 = scmp.lt.s32.totalorder %s130, 5
      %s132 = scalar_select %p131, %s130, 5
      %s133 = smul.addr %s132, 8
      %s134 = scalar_lea.vmem %s2, %s133
      %s135 = smul.u32 3, %s13
      %p136 = scmp.lt.s32.totalorder %s135, 5
      %s137 = scalar_select %p136, %s135, 5
      %s138 = smul.addr %s137, 8
      %s139 = scalar_lea.vmem %s0, %s138
      %s140 = smul.u32 3, %s13
      %s141 = smul.u32 3, %s13
      %p142 = scmp.lt.s32.totalorder %s141, 5
      %s143 = scalar_select %p142, %s141, 5
      %s144 = smul.addr %s143, 8
      %s145 = scalar_lea.vmem %s2, %s144
      %s146 = smul.u32 3, %s13
      %v147 = vld [vmem:[%s139] sm:$0xff]
      %v148 = vld [vmem:[%s139 + $0x8] sm:$0xff]
      %v149 = vld [vmem:[%s139 + $0x10] sm:$0xff]
      %v150 = vld [vmem:[%s1] sm:$0xff]
      %vm151 = vcmask 64512
      %v153 = vsel %vm151, %v147, 0
      %v156 = vsel %vm151, %v148, 0
      %v159 = vsel %vm151, %v149, 0
      %161 = vmatprep.subr.mxu0 0.0
      %162 = vmatpush1.msra.mxu0 %v150
      %163 = vmatprep.subr.mxu0 0.0
      %164 = vmatpush1.msra.mxu0 0.0
      %165 = vmatprep.subr.mxu0 0.0
      %166 = vmatpush1.msra.mxu0 0.0
      %167 = vmatprep.subr.mxu0 0.0
      %168 = vmatpush1.msra.mxu0 0.0
      %169 = vmatprep.subr.mxu0 0.0
      %170 = vmatpush1.msra.mxu0 0.0
      %171 = vmatprep.subr.mxu0 0.0
      %172 = vmatpush1.msra.mxu0 0.0
      %173 = vmatprep.subr.mxu0 0.0
      %174 = vmatpush1.msra.mxu0 0.0
      %175 = vmatprep.subr.mxu0 0.0
      %176 = vmatpush1.msra.mxu0 0.0
      %177 = vmatprep.subr.mxu0 0.0
      %178 = vmatpush1.msra.mxu0 0.0
      %179 = vmatprep.subr.mxu0 0.0
      %180 = vmatpush1.msra.mxu0 0.0
      %181 = vmatprep.subr.mxu0 0.0
      %182 = vmatpush1.msra.mxu0 0.0
      %183 = vmatprep.subr.mxu0 0.0
      %184 = vmatpush1.msra.mxu0 0.0
      %185 = vmatprep.subr.mxu0 0.0
      %186 = vmatpush1.msra.mxu0 0.0
      %187 = vmatprep.subr.mxu0 0.0
      %188 = vmatpush1.msra.mxu0 0.0
      %189 = vmatprep.subr.mxu0 0.0
      %190 = vmatpush1.msra.mxu0 0.0
      %191 = vmatprep.subr.mxu0 0.0
      %192 = vmatpush1.msra.mxu0 0.0
      %193 = vmatprep.subr.mxu0 0.0
      %194 = vmatpush1.msra.mxu0 0.0
      %195 = vmatprep.subr.mxu0 0.0
      %196 = vmatpush1.msra.mxu0 0.0
      %197 = vmatprep.subr.mxu0 0.0
      %198 = vmatpush1.msra.mxu0 0.0
      %199 = vmatprep.subr.mxu0 0.0
      %200 = vmatpush1.msra.mxu0 0.0
      %201 = vmatprep.subr.mxu0 0.0
      %202 = vmatpush1.msra.mxu0 0.0
      %203 = vmatprep.subr.mxu0 0.0
      %204 = vmatpush1.msra.mxu0 0.0
      %205 = vmatprep.subr.mxu0 0.0
      %206 = vmatpush1.msra.mxu0 0.0
      %207 = vmatprep.subr.mxu0 0.0
      %208 = vmatpush1.msra.mxu0 0.0
      %209 = vmatprep.subr.mxu0 0.0
      %210 = vmatpush1.msra.mxu0 0.0
      %211 = vmatprep.subr.mxu0 0.0
      %212 = vmatpush1.msra.mxu0 0.0
      %213 = vmatprep.subr.mxu0 0.0
      %214 = vmatpush1.msra.mxu0 0.0
      %215 = vmatprep.subr.mxu0 0.0
      %216 = vmatpush1.msra.mxu0 0.0
      %217 = vmatprep.subr.mxu0 0.0
      %218 = vmatpush1.msra.mxu0 0.0
      %219 = vmatprep.subr.mxu0 0.0
      %220 = vmatpush1.msra.mxu0 0.0
      %221 = vmatprep.subr.mxu0 0.0
      %222 = vmatpush1.msra.mxu0 0.0
      %223 = vmatprep.subr.mxu0 0.0
      %224 = vmatpush1.msra.mxu0 0.0
      %225 = vmatprep.mubr.f32.mxu0 0.0
      %226 = vmatmul.mubr.f32.gmra.mrb[0].mxu0 %v153
      %v227 = vpop.f32.mrb[0].mxu0
      %v228 = vadd.f32 0.0, %v227
      %v229 = vpop.f32.mrb[0].mxu0
      %230 = vmatprep.mubr.f32.mxu0 0.0
      %231 = vmatmul.mubr.f32.gmra.mrb[0].mxu0 %v156
      %v232 = vpop.f32.mrb[0].mxu0
      %v233 = vadd.f32 0.0, %v232
      %v234 = vpop.f32.mrb[0].mxu0
      %235 = vmatprep.mubr.f32.mxu0 0.0
      %236 = vmatmul.mubr.f32.gmra.mrb[0].mxu0 %v159
      %v237 = vpop.f32.mrb[0].mxu0
      %v238 = vadd.f32 0.0, %v237
      %v239 = vpop.f32.mrb[0].mxu0
      %240 = vdwg.mxu0
      %v241 = vmul.f32 %v228, 1.442695
      %v242 = vpow.pop %v241
      %v243 = vmul.f32 %v233, 1.442695
      %v244 = vpow.pop %v243
      %v245 = vmul.f32 %v238, 1.442695
      %v246 = vpow.pop %v245
      %vm247 = vcmp.ne.f32.partialorder %v242, %v242
      %vm248 = vcmp.ne.f32.partialorder %v244, %v244
      %vm249 = vcmp.ne.f32.partialorder %v246, %v246
      %v250 = vsel %vm247, 0.0, %v242
      %v251 = vsel %vm248, 0.0, %v244
      %v252 = vsel %vm249, 0.0, %v246
      %253 = vst [vmem:[%s145] sm:$0xff] %v250
      %254 = vst [vmem:[%s145 + $0x8] sm:$0xff] %v251
      %255 = vst [vmem:[%s145 + $0x10] sm:$0xff] %v252
      %p256 = scmp.eq.s32.totalorder %s13, 0
      // Predicated region
      $region29: #{_device_forward.3} parent=27 // pred_check
        %p257 = pneg %p256
      $region30: #{_device_forward.3} parent=27 // pred_check_branch
        %259 = sbr.rel (%p257) target = $region32
      $region31: #{_device_forward.3} parent=27 // pred_region
        %v260 = vlaneseq
        %v261 = vand.u32 %v260, 127
        %vm262 = vcmp.lt.s32.totalorder %v261, 32
        %v263 = vsel %vm262, 0.0, %v250
        %264 = vst [vmem:[%s145] sm:$0x1] %v263
      $region32: #{_device_forward.3} parent=27 // pred_fallthru
        _
      %s265 = smul.u32 3, %s13
      %p266 = scmp.lt.s32.totalorder %s265, 5
      %s267 = scalar_select %p266, %s265, 5
      %s268 = smul.addr %s267, 8
      %s269 = scalar_lea.vmem %s2, %s268
      // Predicated region
      $region33: #{_device_forward.3} parent=27 // pred_check
        %p270 = pneg %p78
      $region34: #{_device_forward.3} parent=27 // pred_check_branch
        %272 = sbr.rel (%p270) target = $region36
      $region35: #{_device_forward.3} parent=27 // pred_region
        %s273 = smul.u32 3, %s13
      $region36: #{_device_forward.3} parent=27 // pred_fallthru
        _
    $region28: #{_device_forward.3} parent=5 // pred_fallthru
      _
    %p274 = scmp.le.s32.totalorder 2, %s8
    // Predicated region
    $region37: #{_device_forward.3} parent=5 // pred_check
      %p275 = pneg %p274
    $region38: #{_device_forward.3} parent=5 // pred_check_branch
      %277 = sbr.rel (%p275) target = $region40
    $region39: #{_device_forward.3} parent=5 // pred_region
      %s278 = ssub.s32 %s8, 2
      // Predicated region
      $region41: #{_device_forward.3} parent=39 // pred_check
        %p279 = pneg %p84
      $region42: #{_device_forward.3} parent=39 // pred_check_branch
        %281 = sbr.rel (%p279) target = $region44
      $region43: #{_device_forward.3} parent=39 // pred_region
        %s282 = smul.u32 3, %s14
        %p283 = scmp.lt.s32.totalorder %s282, 5
        %s284 = scalar_select %p283, %s282, 5
        %s285 = smul.addr %s284, 8
        %s286 = scalar_lea.vmem %s2, %s285
      $region44: #{_device_forward.3} parent=39 // pred_fallthru
        _
    $region40: #{_device_forward.3} parent=5 // pred_fallthru
      _
  $region6: #{_device_forward.3} parent=0 // loop_footer
    %s12 = sadd.s32 1, %s8
  $region7: #{_device_forward.3} parent=0 // loop_footer_branch
    %7 = sbr.rel target = $region3
  $region8: #{_device_forward.3} parent=0 // loop_exit
    _

</llo_original>
